<compile_context>
chip_gen: v7x
topology: tpu7x:2x2x1
jax: 0.10.0
libtpu: 0.0.40
codegen_flags: <defaults>
</compile_context>

<pallas_src>
import math
import functools

import jax
import jax.numpy as jnp
import numpy as np
from jax.experimental import pallas as pl
from jax.experimental.pallas import tpu as pltpu


def _round_up(x, m):
    return (x + m - 1) // m * m


# ------------------------------- the kernel --------------------------------

def generator_kernel(
    x_ref,      # (Cin_p, N)       input slab, N = (B/batch_blocks)*T
    fw_ref,     # (R, 3*Cin_p)     fused first_conv weight (bf16)
    cw_ref,     # (L, G, 3*R)      fused dilated-conv weights (bf16)
    sow_ref,    # (L, S+R, G//2)   fused skip||out 1x1 weights (bf16)
    l1w_ref,    # (S, S)           last conv #1 weight (bf16)
    l1b_ref,    # (S, 1)           last conv #1 bias (f32)
    l2w_ref,    # (Cout, S)        last conv #2 weight (bf16)
    l2b_ref,    # (Cout, 1)        last conv #2 bias (f32)
    out_ref,    # (Cout, N)
    *,
    dilations,
    gate_half,
    skip_ch,
    seg_len,    # = T; taps must stay inside each folded batch segment
):
    f32 = jnp.float32
    bf16 = jnp.bfloat16
    N = x_ref.shape[1]

    # ---- hoisted shift-validity masks: one iota, one 0/1 mask per offset ----
    t_in_seg = jax.lax.broadcasted_iota(jnp.int32, (1, N), 1) % seg_len
    masks = {}
    for d in sorted({1, *dilations}):
        masks[-d] = (t_in_seg >= d).astype(f32)              # offset -d valid
        masks[+d] = (t_in_seg < seg_len - d).astype(f32)     # offset +d valid

    def stack3(x, d):
        # rows = [x shifted by -d ; x ; x shifted by +d]; shifted taps are
        # zeroed outside each length-seg_len segment (no cross-batch leak).
        # pltpu.roll(x, s)[:, t] == x[:, (t - s) mod N]
        left = pltpu.roll(x, shift=d, axis=1) * masks[-d]      # x[:, t - d]
        right = pltpu.roll(x, shift=N - d, axis=1) * masks[d]  # x[:, t + d]
        return jnp.concatenate([left, x, right], axis=0)

    # first_conv: Conv1d(Cin, R, 3, padding=1, bias=False)
    x = jnp.dot(fw_ref[...], stack3(x_ref[...], 1).astype(bf16),
                preferred_element_type=f32)                    # (R, N) f32

    skips = jnp.zeros((skip_ch, N), f32)
    sqrt_half = f32(math.sqrt(0.5))

    for l, d in enumerate(dilations):   # static unroll over residual layers
        # dilated 3-tap conv as one fused matmul: (G, 3R) @ (3R, N)
        y = jnp.dot(cw_ref[l], stack3(x, d).astype(bf16),
                    preferred_element_type=f32)                # (G, N)
        g = jnp.tanh(y[:gate_half]) * jax.nn.sigmoid(y[gate_half:])  # (Gh, N)
        # fused skip + out 1x1 convs: (S+R, Gh) @ (Gh, N)
        so = jnp.dot(sow_ref[l], g.astype(bf16),
                     preferred_element_type=f32)               # (S+R, N)
        skips = skips + so[:skip_ch]
        x = (so[skip_ch:] + x) * sqrt_half

    skips = skips * f32(math.sqrt(1.0 / len(dilations)))

    # last_conv_layers: ReLU -> 1x1 conv (bias) -> ReLU -> 1x1 conv (bias)
    h = jnp.maximum(skips, 0.0)
    h = jnp.dot(l1w_ref[...], h.astype(bf16),
                preferred_element_type=f32) + l1b_ref[...]
    h = jnp.maximum(h, 0.0)
    out = jnp.dot(l2w_ref[...], h.astype(bf16),
                  preferred_element_type=f32) + l2b_ref[...]
    out_ref[...] = out.astype(out_ref.dtype)


# ------------------------------- wrapper ------------------------------------

def generator_forward(x, kparams, dilations, *, batch_blocks=1):
    """x: (B, Cin, T) float32 -> (B, Cout, T) float32 (pre-postnet output)."""
    B, Cin, T = x.shape
    fw = kparams["first_w"]        # (R, 3*Cin_p)  bf16
    cw = kparams["conv_w"]         # (L, G, 3*R)   bf16
    sow = kparams["skip_out_w"]    # (L, S+R, Gh)  bf16
    l1w, l1b = kparams["l1_w"], kparams["l1_b"]    # (S, S) bf16, (S, 1) f32
    l2w, l2b = kparams["l2_w"], kparams["l2_b"]    # (Cout, S) bf16, (Cout, 1) f32

    R = fw.shape[0]
    Cin_p = fw.shape[1] // 3
    L, G, _ = cw.shape
    Gh = G // 2
    S = sow.shape[1] - R
    Cout = l2w.shape[0]
    assert sow.shape[2] == Gh and len(dilations) == L
    assert max(dilations) < T, "dilation must be < T (no time tiling/halo here)"
    assert B % batch_blocks == 0
    N = B * T
    Nb = (B // batch_blocks) * T

    # Fold batch into the lane axis; zero-pad Cin up to a multiple of 8 so the
    # in-kernel sublane concat of the 3 conv taps is tile-aligned.
    x2d = jnp.transpose(x, (1, 0, 2)).reshape(Cin, N)
    if Cin_p > Cin:
        x2d = jnp.pad(x2d, ((0, Cin_p - Cin), (0, 0)))

    kernel = functools.partial(
        generator_kernel,
        dilations=tuple(dilations),
        gate_half=Gh,
        skip_ch=S,
        seg_len=T,
    )

    # Weights use constant index_maps -> fetched once.  (At production widths
    # they should be single-buffered / streamed per layer; negligible here.)
    grid_spec = pltpu.PrefetchScalarGridSpec(
        num_scalar_prefetch=0,
        grid=(batch_blocks,),
        in_specs=[
            pl.BlockSpec((Cin_p, Nb), lambda i: (0, i)),
            pl.BlockSpec(fw.shape, lambda i: (0, 0)),
            pl.BlockSpec(cw.shape, lambda i: (0, 0, 0)),
            pl.BlockSpec(sow.shape, lambda i: (0, 0, 0)),
            pl.BlockSpec(l1w.shape, lambda i: (0, 0)),
            pl.BlockSpec(l1b.shape, lambda i: (0, 0)),
            pl.BlockSpec(l2w.shape, lambda i: (0, 0)),
            pl.BlockSpec(l2b.shape, lambda i: (0, 0)),
        ],
        out_specs=pl.BlockSpec((Cout, Nb), lambda i: (0, i)),
    )

    out2d = pl.pallas_call(
        kernel,
        out_shape=jax.ShapeDtypeStruct((Cout, N), jnp.float32),
        grid_spec=grid_spec,
        # batch_blocks=1 -> everything in one step (best for 1-TC v5e/v6e);
        # on v7x pass batch_blocks=2 so both TensorCores get a parallel step.
        compiler_params=pltpu.CompilerParams(
            dimension_semantics=("parallel",)
        ),
    )(x2d, fw, cw, sow, l1w, l1b, l2w, l2b)

    return jnp.transpose(out2d.reshape(Cout, B, T), (1, 0, 2))


# ---------------------- wrapper-side weight layout prep ----------------------

def prepare_kernel_params(pt):
    """PyTorch-layout params -> fused / bf16 / padded kernel-layout params."""
    first_w = pt["first_w"]                      # (R, Cin, 3)
    conv_w = pt["conv_w"]                        # (L, G, R, 3)
    R, Cin, _ = first_w.shape
    Cin_p = _round_up(Cin, 8)

    # fused 3-tap weights: W[o, k*C + c] = w[o, c, k]  (tap k uses offset (k-1)*d)
    fw = jnp.pad(first_w, ((0, 0), (0, Cin_p - Cin), (0, 0)))      # (R, Cin_p, 3)
    fw = jnp.transpose(fw, (0, 2, 1)).reshape(R, 3 * Cin_p)

    L, G, _, _ = conv_w.shape
    cw = jnp.transpose(conv_w, (0, 1, 3, 2)).reshape(L, G, 3 * R)  # (L, G, 3R)

    # fused skip (rows 0:S) || out (rows S:S+R) 1x1 weights
    sow = jnp.concatenate([pt["skip_w"], pt["out_w"]], axis=1)     # (L, S+R, Gh)

    bf16 = jnp.bfloat16
    return {
        "first_w": fw.astype(bf16),
        "conv_w": cw.astype(bf16),
        "skip_out_w": sow.astype(bf16),
        "l1_w": pt["l1_w"].astype(bf16),
        "l1_b": pt["l1_b"][:, None].astype(jnp.float32),
        "l2_w": pt["l2_w"].astype(bf16),
        "l2_b": pt["l2_b"][:, None].astype(jnp.float32),
    }


# --------------------------- pure-JAX reference -----------------------------

def _conv1d_ref(x, w, dilation):
    """x: (B, Cin, T), w: (Cout, Cin, K) PyTorch layout, 'same' padding."""
    pad = dilation * (w.shape[-1] - 1) // 2
    return jax.lax.conv_general_dilated(
        x, w,
        window_strides=(1,),
        padding=[(pad, pad)],
        rhs_dilation=(dilation,),
        dimension_numbers=("NCH", "OIH", "NCH"),
    )


def generator_reference(x, pt, dilations):
    L = len(dilations)
    gate_half = pt["conv_w"].shape[1] // 2
    B, _, T = x.shape
    S = pt["skip_w"].shape[1]
    h = _conv1d_ref(x, pt["first_w"], 1)
    skips = jnp.zeros((B, S, T), jnp.float32)
    for l in range(L):
        y = _conv1d_ref(h, pt["conv_w"][l], dilations[l])
        a, b = y[:, :gate_half], y[:, gate_half:]
        g = jnp.tanh(a) * jax.nn.sigmoid(b)
        skips = skips + jnp.einsum("og,bgt->bot", pt["skip_w"][l], g)
        o = jnp.einsum("og,bgt->bot", pt["out_w"][l], g)
        h = (o + h) * math.sqrt(0.5)
    skips = skips * math.sqrt(1.0 / L)
    z = jnp.maximum(skips, 0.0)
    z = jnp.einsum("os,bst->bot", pt["l1_w"], z) + pt["l1_b"][None, :, None]
    z = jnp.maximum(z, 0.0)
    z = jnp.einsum("os,bst->bot", pt["l2_w"], z) + pt["l2_b"][None, :, None]
    return z


# ------------------------------ param init ----------------------------------

def init_params(key, *, in_channels, out_channels, num_layers,
                residual_channels, gate_channels, skip_out_channels):
    R, G, S = residual_channels, gate_channels, skip_out_channels
    Gh = G // 2
    ks = jax.random.split(key, 8)

    def w(k, shape, fan_in):
        return jax.random.normal(k, shape, jnp.float32) / math.sqrt(fan_in)

    # PyTorch-layout weights (Conv1d: (Cout, Cin, K)); convs are bias=False as
    # in Generator(bias=False); last 1x1 convs have bias.
    return {
        "first_w": w(ks[0], (R, in_channels, 3), in_channels * 3),
        "conv_w":  w(ks[1], (num_layers, G, R, 3), R * 3),
        "out_w":   w(ks[2], (num_layers, R, Gh), Gh),
        "skip_w":  w(ks[3], (num_layers, S, Gh), Gh),
        "l1_w":    w(ks[4], (S, S), S),
        "l1_b":    0.01 * jax.random.normal(ks[5], (S,), jnp.float32),
        "l2_w":    w(ks[6], (out_channels, S), S),
        "l2_b":    0.01 * jax.random.normal(ks[7], (out_channels,), jnp.float32),
    }


# --------------------------------- main --------------------------------------

if __name__ == "__main__":
    # Small but structurally faithful config.
    B = 2
    in_channels = 4
    out_channels = 1
    num_layers = 4
    num_stacks = 2
    residual_channels = 32
    gate_channels = 32
    skip_out_channels = 32
    T = 128

    assert num_layers % num_stacks == 0
    per_stack = num_layers // num_stacks
    dilations = [2 ** (l % per_stack) for l in range(num_layers)]

    key = jax.random.PRNGKey(0)
    k_x, k_p = jax.random.split(key)
    x = jax.random.normal(k_x, (B, in_channels, T), jnp.float32)

    pt_params = init_params(
        k_p,
        in_channels=in_channels,
        out_channels=out_channels,
        num_layers=num_layers,
        residual_channels=residual_channels,
        gate_channels=gate_channels,
        skip_out_channels=skip_out_channels,
    )
    kern_params = prepare_kernel_params(pt_params)

    out = generator_forward(x, kern_params, tuple(dilations))
    out = jax.block_until_ready(out)

    ref = jax.block_until_ready(generator_reference(x, pt_params, dilations))

    # Kernel uses bf16 matmul operands (f32 accumulation), so compare with a
    # bf16-level tolerance against the f32 reference.
    np.testing.assert_allclose(np.asarray(out), np.asarray(ref),
                               rtol=2e-2, atol=2e-2)
    print("KERNEL_OK")
</pallas_src>

<mosaic_0001>
module attributes {stable_mosaic.version = 11 : i64} {
  func.func @generator_kernel(%arg0: i32, %arg1: memref<8x256xf32, #tpu.memory_space<vmem>>, %arg2: memref<32x24xbf16, #tpu.memory_space<vmem>>, %arg3: memref<4x32x96xbf16, #tpu.memory_space<vmem>>, %arg4: memref<4x64x16xbf16, #tpu.memory_space<vmem>>, %arg5: memref<32x32xbf16, #tpu.memory_space<vmem>>, %arg6: memref<32x1xf32, #tpu.memory_space<vmem>>, %arg7: memref<1x32xbf16, #tpu.memory_space<vmem>>, %arg8: memref<1x1xf32, #tpu.memory_space<vmem>>, %arg9: memref<1x256xf32, #tpu.memory_space<vmem>>) attributes {dimension_semantics = [#tpu.dimension_semantics<parallel>], iteration_bounds = array<i64: 1>, scalar_prefetch = 0 : i64, scratch_operands = 0 : i64, tpu.core_type = #tpu.core_type<tc>, window_params = [{transform_indices = @transform_0, window_bounds = array<i64: 8, 256>}, {pipeline_mode = #tpu.pipeline_mode<synchronous>, transform_indices = @transform_1, window_bounds = array<i64: 32, 24>}, {pipeline_mode = #tpu.pipeline_mode<synchronous>, transform_indices = @transform_2, window_bounds = array<i64: 4, 32, 96>}, {pipeline_mode = #tpu.pipeline_mode<synchronous>, transform_indices = @transform_3, window_bounds = array<i64: 4, 64, 16>}, {pipeline_mode = #tpu.pipeline_mode<synchronous>, transform_indices = @transform_4, window_bounds = array<i64: 32, 32>}, {pipeline_mode = #tpu.pipeline_mode<synchronous>, transform_indices = @transform_5, window_bounds = array<i64: 32, 1>}, {pipeline_mode = #tpu.pipeline_mode<synchronous>, transform_indices = @transform_6, window_bounds = array<i64: 1, 32>}, {pipeline_mode = #tpu.pipeline_mode<synchronous>, transform_indices = @transform_7, window_bounds = array<i64: 1, 1>}, {transform_indices = @transform_8, window_bounds = array<i64: 1, 256>}]} {
    %0 = tpu.iota {dimensions = array<i32: 1>} : vector<1x256xi32>
    %c128_i32 = arith.constant 128 : i32
    %c0_i32 = arith.constant 0 : i32
    %1 = arith.cmpi eq, %c128_i32, %c0_i32 : i32
    %c1_i32 = arith.constant 1 : i32
    %2 = arith.select %1, %c1_i32, %c128_i32 : i32
    %3 = vector.broadcast %2 : i32 to vector<1x256xi32>
    %4 = arith.remsi %0, %3 : vector<1x256xi32>
    %c0_i32_0 = arith.constant 0 : i32
    %5 = vector.broadcast %c0_i32_0 : i32 to vector<1x256xi32>
    %6 = arith.cmpi ne, %4, %5 : vector<1x256xi32>
    %c0_i32_1 = arith.constant 0 : i32
    %7 = vector.broadcast %c0_i32_1 : i32 to vector<1x256xi32>
    %8 = arith.cmpi slt, %4, %7 : vector<1x256xi32>
    %c0_i32_2 = arith.constant 0 : i32
    %9 = arith.cmpi slt, %2, %c0_i32_2 : i32
    %10 = vector.broadcast %9 : i1 to vector<1x256xi1>
    %11 = vector.broadcast %10 : vector<1x256xi1> to vector<1x256xi1>
    %12 = arith.xori %8, %11 : vector<1x256xi1>
    %13 = arith.andi %12, %6 : vector<1x256xi1>
    %14 = vector.broadcast %2 : i32 to vector<1x256xi32>
    %15 = arith.addi %4, %14 : vector<1x256xi32>
    %16 = arith.select %13, %15, %4 : vector<1x256xi1>, vector<1x256xi32>
    %c1_i32_3 = arith.constant 1 : i32
    %17 = vector.broadcast %c1_i32_3 : i32 to vector<1x256xi32>
    %18 = arith.cmpi sge, %16, %17 : vector<1x256xi32>
    %19 = arith.extui %18 : vector<1x256xi1> to vector<1x256xi32>
    %20 = arith.sitofp %19 : vector<1x256xi32> to vector<1x256xf32>
    %c127_i32 = arith.constant 127 : i32
    %21 = vector.broadcast %c127_i32 : i32 to vector<1x256xi32>
    %22 = arith.cmpi slt, %16, %21 : vector<1x256xi32>
    %23 = arith.extui %22 : vector<1x256xi1> to vector<1x256xi32>
    %24 = arith.sitofp %23 : vector<1x256xi32> to vector<1x256xf32>
    %c2_i32 = arith.constant 2 : i32
    %25 = vector.broadcast %c2_i32 : i32 to vector<1x256xi32>
    %26 = arith.cmpi sge, %16, %25 : vector<1x256xi32>
    %27 = arith.extui %26 : vector<1x256xi1> to vector<1x256xi32>
    %28 = arith.sitofp %27 : vector<1x256xi32> to vector<1x256xf32>
    %c126_i32 = arith.constant 126 : i32
    %29 = vector.broadcast %c126_i32 : i32 to vector<1x256xi32>
    %30 = arith.cmpi slt, %16, %29 : vector<1x256xi32>
    %31 = arith.extui %30 : vector<1x256xi1> to vector<1x256xi32>
    %32 = arith.sitofp %31 : vector<1x256xi32> to vector<1x256xf32>
    %c0 = arith.constant 0 : index
    %c0_4 = arith.constant 0 : index
    %33 = vector.load %arg2[%c0, %c0_4] : memref<32x24xbf16, #tpu.memory_space<vmem>>, vector<32x24xbf16>
    %c0_5 = arith.constant 0 : index
    %c0_6 = arith.constant 0 : index
    %34 = vector.load %arg1[%c0_5, %c0_6] : memref<8x256xf32, #tpu.memory_space<vmem>>, vector<8x256xf32>
    %c1_i32_7 = arith.constant 1 : i32
    %35 = tpu.dynamic_rotate %34 by %c1_i32_7 dim 1 : vector<8x256xf32>, i32 -> vector<8x256xf32>
    %36 = vector.broadcast %20 : vector<1x256xf32> to vector<8x256xf32>
    %37 = arith.mulf %35, %36 : vector<8x256xf32>
    %c255_i32 = arith.constant 255 : i32
    %38 = tpu.dynamic_rotate %34 by %c255_i32 dim 1 : vector<8x256xf32>, i32 -> vector<8x256xf32>
    %39 = vector.broadcast %24 : vector<1x256xf32> to vector<8x256xf32>
    %40 = arith.mulf %38, %39 : vector<8x256xf32>
    %41 = tpu.concatenate %37, %34, %40 in 0 : vector<8x256xf32>, vector<8x256xf32>, vector<8x256xf32> -> vector<24x256xf32>
    %42 = arith.truncf %41 : vector<24x256xf32> to vector<24x256xbf16>
    %cst = arith.constant dense<0.000000e+00> : vector<32x256xf32>
    %43 = tpu.matmul %33, %42, %cst {dimension_numbers = #tpu.dot_dimension_numbers<[1], [0], [0], [1], [0, 0, 1, 1], [], []>} : vector<32x24xbf16>, vector<24x256xbf16>, vector<32x256xf32> -> vector<32x256xf32>
    %cst_8 = arith.constant 0.000000e+00 : f32
    %44 = vector.broadcast %cst_8 : f32 to vector<32x256xf32>
    %c0_9 = arith.constant 0 : index
    %c0_10 = arith.constant 0 : index
    %c0_11 = arith.constant 0 : index
    %45 = vector.load %arg3[%c0_9, %c0_10, %c0_11] : memref<4x32x96xbf16, #tpu.memory_space<vmem>>, vector<1x32x96xbf16>
    %46 = vector.shape_cast %45 : vector<1x32x96xbf16> to vector<32x96xbf16>
    %c1_i32_12 = arith.constant 1 : i32
    %47 = tpu.dynamic_rotate %43 by %c1_i32_12 dim 1 : vector<32x256xf32>, i32 -> vector<32x256xf32>
    %48 = vector.broadcast %20 : vector<1x256xf32> to vector<32x256xf32>
    %49 = arith.mulf %47, %48 : vector<32x256xf32>
    %c255_i32_13 = arith.constant 255 : i32
    %50 = tpu.dynamic_rotate %43 by %c255_i32_13 dim 1 : vector<32x256xf32>, i32 -> vector<32x256xf32>
    %51 = vector.broadcast %24 : vector<1x256xf32> to vector<32x256xf32>
    %52 = arith.mulf %50, %51 : vector<32x256xf32>
    %53 = tpu.concatenate %49, %43, %52 in 0 : vector<32x256xf32>, vector<32x256xf32>, vector<32x256xf32> -> vector<96x256xf32>
    %54 = arith.truncf %53 : vector<96x256xf32> to vector<96x256xbf16>
    %cst_14 = arith.constant dense<0.000000e+00> : vector<32x256xf32>
    %55 = tpu.matmul %46, %54, %cst_14 {dimension_numbers = #tpu.dot_dimension_numbers<[1], [0], [0], [1], [0, 0, 1, 1], [], []>} : vector<32x96xbf16>, vector<96x256xbf16>, vector<32x256xf32> -> vector<32x256xf32>
    %56 = vector.extract_strided_slice %55 {offsets = [0, 0], sizes = [16, 256], strides = [1, 1]} : vector<32x256xf32> to vector<16x256xf32>
    %57 = math.tanh %56 : vector<16x256xf32>
    %58 = vector.extract_strided_slice %55 {offsets = [16, 0], sizes = [16, 256], strides = [1, 1]} : vector<32x256xf32> to vector<16x256xf32>
    %59 = arith.negf %58 : vector<16x256xf32>
    %60 = math.exp %59 : vector<16x256xf32>
    %cst_15 = arith.constant 1.000000e+00 : f32
    %61 = vector.broadcast %cst_15 : f32 to vector<16x256xf32>
    %62 = arith.addf %61, %60 : vector<16x256xf32>
    %63 = arith.divf %61, %62 : vector<16x256xf32>
    %64 = arith.mulf %57, %63 : vector<16x256xf32>
    %c0_16 = arith.constant 0 : index
    %c0_17 = arith.constant 0 : index
    %c0_18 = arith.constant 0 : index
    %65 = vector.load %arg4[%c0_16, %c0_17, %c0_18] : memref<4x64x16xbf16, #tpu.memory_space<vmem>>, vector<1x64x16xbf16>
    %66 = vector.shape_cast %65 : vector<1x64x16xbf16> to vector<64x16xbf16>
    %67 = arith.truncf %64 : vector<16x256xf32> to vector<16x256xbf16>
    %cst_19 = arith.constant dense<0.000000e+00> : vector<64x256xf32>
    %68 = tpu.matmul %66, %67, %cst_19 {dimension_numbers = #tpu.dot_dimension_numbers<[1], [0], [0], [1], [0, 0, 1, 1], [], []>} : vector<64x16xbf16>, vector<16x256xbf16>, vector<64x256xf32> -> vector<64x256xf32>
    %69 = vector.extract_strided_slice %68 {offsets = [0, 0], sizes = [32, 256], strides = [1, 1]} : vector<64x256xf32> to vector<32x256xf32>
    %70 = arith.addf %44, %69 : vector<32x256xf32>
    %71 = vector.extract_strided_slice %68 {offsets = [32, 0], sizes = [32, 256], strides = [1, 1]} : vector<64x256xf32> to vector<32x256xf32>
    %72 = arith.addf %71, %43 : vector<32x256xf32>
    %cst_20 = arith.constant 0.707106769 : f32
    %73 = vector.broadcast %cst_20 : f32 to vector<32x256xf32>
    %74 = arith.mulf %72, %73 : vector<32x256xf32>
    %c1 = arith.constant 1 : index
    %c0_21 = arith.constant 0 : index
    %c0_22 = arith.constant 0 : index
    %75 = vector.load %arg3[%c1, %c0_21, %c0_22] : memref<4x32x96xbf16, #tpu.memory_space<vmem>>, vector<1x32x96xbf16>
    %76 = vector.shape_cast %75 : vector<1x32x96xbf16> to vector<32x96xbf16>
    %c2_i32_23 = arith.constant 2 : i32
    %77 = tpu.dynamic_rotate %74 by %c2_i32_23 dim 1 : vector<32x256xf32>, i32 -> vector<32x256xf32>
    %78 = vector.broadcast %28 : vector<1x256xf32> to vector<32x256xf32>
    %79 = arith.mulf %77, %78 : vector<32x256xf32>
    %c254_i32 = arith.constant 254 : i32
    %80 = tpu.dynamic_rotate %74 by %c254_i32 dim 1 : vector<32x256xf32>, i32 -> vector<32x256xf32>
    %81 = vector.broadcast %32 : vector<1x256xf32> to vector<32x256xf32>
    %82 = arith.mulf %80, %81 : vector<32x256xf32>
    %83 = tpu.concatenate %79, %74, %82 in 0 : vector<32x256xf32>, vector<32x256xf32>, vector<32x256xf32> -> vector<96x256xf32>
    %84 = arith.truncf %83 : vector<96x256xf32> to vector<96x256xbf16>
    %cst_24 = arith.constant dense<0.000000e+00> : vector<32x256xf32>
    %85 = tpu.matmul %76, %84, %cst_24 {dimension_numbers = #tpu.dot_dimension_numbers<[1], [0], [0], [1], [0, 0, 1, 1], [], []>} : vector<32x96xbf16>, vector<96x256xbf16>, vector<32x256xf32> -> vector<32x256xf32>
    %86 = vector.extract_strided_slice %85 {offsets = [0, 0], sizes = [16, 256], strides = [1, 1]} : vector<32x256xf32> to vector<16x256xf32>
    %87 = math.tanh %86 : vector<16x256xf32>
    %88 = vector.extract_strided_slice %85 {offsets = [16, 0], sizes = [16, 256], strides = [1, 1]} : vector<32x256xf32> to vector<16x256xf32>
    %89 = arith.negf %88 : vector<16x256xf32>
    %90 = math.exp %89 : vector<16x256xf32>
    %cst_25 = arith.constant 1.000000e+00 : f32
    %91 = vector.broadcast %cst_25 : f32 to vector<16x256xf32>
    %92 = arith.addf %91, %90 : vector<16x256xf32>
    %93 = arith.divf %91, %92 : vector<16x256xf32>
    %94 = arith.mulf %87, %93 : vector<16x256xf32>
    %c1_26 = arith.constant 1 : index
    %c0_27 = arith.constant 0 : index
    %c0_28 = arith.constant 0 : index
    %95 = vector.load %arg4[%c1_26, %c0_27, %c0_28] : memref<4x64x16xbf16, #tpu.memory_space<vmem>>, vector<1x64x16xbf16>
    %96 = vector.shape_cast %95 : vector<1x64x16xbf16> to vector<64x16xbf16>
    %97 = arith.truncf %94 : vector<16x256xf32> to vector<16x256xbf16>
    %cst_29 = arith.constant dense<0.000000e+00> : vector<64x256xf32>
    %98 = tpu.matmul %96, %97, %cst_29 {dimension_numbers = #tpu.dot_dimension_numbers<[1], [0], [0], [1], [0, 0, 1, 1], [], []>} : vector<64x16xbf16>, vector<16x256xbf16>, vector<64x256xf32> -> vector<64x256xf32>
    %99 = vector.extract_strided_slice %98 {offsets = [0, 0], sizes = [32, 256], strides = [1, 1]} : vector<64x256xf32> to vector<32x256xf32>
    %100 = arith.addf %70, %99 : vector<32x256xf32>
    %101 = vector.extract_strided_slice %98 {offsets = [32, 0], sizes = [32, 256], strides = [1, 1]} : vector<64x256xf32> to vector<32x256xf32>
    %102 = arith.addf %101, %74 : vector<32x256xf32>
    %cst_30 = arith.constant 0.707106769 : f32
    %103 = vector.broadcast %cst_30 : f32 to vector<32x256xf32>
    %104 = arith.mulf %102, %103 : vector<32x256xf32>
    %c2 = arith.constant 2 : index
    %c0_31 = arith.constant 0 : index
    %c0_32 = arith.constant 0 : index
    %105 = vector.load %arg3[%c2, %c0_31, %c0_32] : memref<4x32x96xbf16, #tpu.memory_space<vmem>>, vector<1x32x96xbf16>
    %106 = vector.shape_cast %105 : vector<1x32x96xbf16> to vector<32x96xbf16>
    %c1_i32_33 = arith.constant 1 : i32
    %107 = tpu.dynamic_rotate %104 by %c1_i32_33 dim 1 : vector<32x256xf32>, i32 -> vector<32x256xf32>
    %108 = vector.broadcast %20 : vector<1x256xf32> to vector<32x256xf32>
    %109 = arith.mulf %107, %108 : vector<32x256xf32>
    %c255_i32_34 = arith.constant 255 : i32
    %110 = tpu.dynamic_rotate %104 by %c255_i32_34 dim 1 : vector<32x256xf32>, i32 -> vector<32x256xf32>
    %111 = vector.broadcast %24 : vector<1x256xf32> to vector<32x256xf32>
    %112 = arith.mulf %110, %111 : vector<32x256xf32>
    %113 = tpu.concatenate %109, %104, %112 in 0 : vector<32x256xf32>, vector<32x256xf32>, vector<32x256xf32> -> vector<96x256xf32>
    %114 = arith.truncf %113 : vector<96x256xf32> to vector<96x256xbf16>
    %cst_35 = arith.constant dense<0.000000e+00> : vector<32x256xf32>
    %115 = tpu.matmul %106, %114, %cst_35 {dimension_numbers = #tpu.dot_dimension_numbers<[1], [0], [0], [1], [0, 0, 1, 1], [], []>} : vector<32x96xbf16>, vector<96x256xbf16>, vector<32x256xf32> -> vector<32x256xf32>
    %116 = vector.extract_strided_slice %115 {offsets = [0, 0], sizes = [16, 256], strides = [1, 1]} : vector<32x256xf32> to vector<16x256xf32>
    %117 = math.tanh %116 : vector<16x256xf32>
    %118 = vector.extract_strided_slice %115 {offsets = [16, 0], sizes = [16, 256], strides = [1, 1]} : vector<32x256xf32> to vector<16x256xf32>
    %119 = arith.negf %118 : vector<16x256xf32>
    %120 = math.exp %119 : vector<16x256xf32>
    %cst_36 = arith.constant 1.000000e+00 : f32
    %121 = vector.broadcast %cst_36 : f32 to vector<16x256xf32>
    %122 = arith.addf %121, %120 : vector<16x256xf32>
    %123 = arith.divf %121, %122 : vector<16x256xf32>
    %124 = arith.mulf %117, %123 : vector<16x256xf32>
    %c2_37 = arith.constant 2 : index
    %c0_38 = arith.constant 0 : index
    %c0_39 = arith.constant 0 : index
    %125 = vector.load %arg4[%c2_37, %c0_38, %c0_39] : memref<4x64x16xbf16, #tpu.memory_space<vmem>>, vector<1x64x16xbf16>
    %126 = vector.shape_cast %125 : vector<1x64x16xbf16> to vector<64x16xbf16>
    %127 = arith.truncf %124 : vector<16x256xf32> to vector<16x256xbf16>
    %cst_40 = arith.constant dense<0.000000e+00> : vector<64x256xf32>
    %128 = tpu.matmul %126, %127, %cst_40 {dimension_numbers = #tpu.dot_dimension_numbers<[1], [0], [0], [1], [0, 0, 1, 1], [], []>} : vector<64x16xbf16>, vector<16x256xbf16>, vector<64x256xf32> -> vector<64x256xf32>
    %129 = vector.extract_strided_slice %128 {offsets = [0, 0], sizes = [32, 256], strides = [1, 1]} : vector<64x256xf32> to vector<32x256xf32>
    %130 = arith.addf %100, %129 : vector<32x256xf32>
    %131 = vector.extract_strided_slice %128 {offsets = [32, 0], sizes = [32, 256], strides = [1, 1]} : vector<64x256xf32> to vector<32x256xf32>
    %132 = arith.addf %131, %104 : vector<32x256xf32>
    %cst_41 = arith.constant 0.707106769 : f32
    %133 = vector.broadcast %cst_41 : f32 to vector<32x256xf32>
    %134 = arith.mulf %132, %133 : vector<32x256xf32>
    %c3 = arith.constant 3 : index
    %c0_42 = arith.constant 0 : index
    %c0_43 = arith.constant 0 : index
    %135 = vector.load %arg3[%c3, %c0_42, %c0_43] : memref<4x32x96xbf16, #tpu.memory_space<vmem>>, vector<1x32x96xbf16>
    %136 = vector.shape_cast %135 : vector<1x32x96xbf16> to vector<32x96xbf16>
    %c2_i32_44 = arith.constant 2 : i32
    %137 = tpu.dynamic_rotate %134 by %c2_i32_44 dim 1 : vector<32x256xf32>, i32 -> vector<32x256xf32>
    %138 = vector.broadcast %28 : vector<1x256xf32> to vector<32x256xf32>
    %139 = arith.mulf %137, %138 : vector<32x256xf32>
    %c254_i32_45 = arith.constant 254 : i32
    %140 = tpu.dynamic_rotate %134 by %c254_i32_45 dim 1 : vector<32x256xf32>, i32 -> vector<32x256xf32>
    %141 = vector.broadcast %32 : vector<1x256xf32> to vector<32x256xf32>
    %142 = arith.mulf %140, %141 : vector<32x256xf32>
    %143 = tpu.concatenate %139, %134, %142 in 0 : vector<32x256xf32>, vector<32x256xf32>, vector<32x256xf32> -> vector<96x256xf32>
    %144 = arith.truncf %143 : vector<96x256xf32> to vector<96x256xbf16>
    %cst_46 = arith.constant dense<0.000000e+00> : vector<32x256xf32>
    %145 = tpu.matmul %136, %144, %cst_46 {dimension_numbers = #tpu.dot_dimension_numbers<[1], [0], [0], [1], [0, 0, 1, 1], [], []>} : vector<32x96xbf16>, vector<96x256xbf16>, vector<32x256xf32> -> vector<32x256xf32>
    %146 = vector.extract_strided_slice %145 {offsets = [0, 0], sizes = [16, 256], strides = [1, 1]} : vector<32x256xf32> to vector<16x256xf32>
    %147 = math.tanh %146 : vector<16x256xf32>
    %148 = vector.extract_strided_slice %145 {offsets = [16, 0], sizes = [16, 256], strides = [1, 1]} : vector<32x256xf32> to vector<16x256xf32>
    %149 = arith.negf %148 : vector<16x256xf32>
    %150 = math.exp %149 : vector<16x256xf32>
    %cst_47 = arith.constant 1.000000e+00 : f32
    %151 = vector.broadcast %cst_47 : f32 to vector<16x256xf32>
    %152 = arith.addf %151, %150 : vector<16x256xf32>
    %153 = arith.divf %151, %152 : vector<16x256xf32>
    %154 = arith.mulf %147, %153 : vector<16x256xf32>
    %c3_48 = arith.constant 3 : index
    %c0_49 = arith.constant 0 : index
    %c0_50 = arith.constant 0 : index
    %155 = vector.load %arg4[%c3_48, %c0_49, %c0_50] : memref<4x64x16xbf16, #tpu.memory_space<vmem>>, vector<1x64x16xbf16>
    %156 = vector.shape_cast %155 : vector<1x64x16xbf16> to vector<64x16xbf16>
    %157 = arith.truncf %154 : vector<16x256xf32> to vector<16x256xbf16>
    %cst_51 = arith.constant dense<0.000000e+00> : vector<64x256xf32>
    %158 = tpu.matmul %156, %157, %cst_51 {dimension_numbers = #tpu.dot_dimension_numbers<[1], [0], [0], [1], [0, 0, 1, 1], [], []>} : vector<64x16xbf16>, vector<16x256xbf16>, vector<64x256xf32> -> vector<64x256xf32>
    %159 = vector.extract_strided_slice %158 {offsets = [0, 0], sizes = [32, 256], strides = [1, 1]} : vector<64x256xf32> to vector<32x256xf32>
    %160 = arith.addf %130, %159 : vector<32x256xf32>
    %cst_52 = arith.constant 5.000000e-01 : f32
    %161 = vector.broadcast %cst_52 : f32 to vector<32x256xf32>
    %162 = arith.mulf %160, %161 : vector<32x256xf32>
    %cst_53 = arith.constant 0.000000e+00 : f32
    %163 = vector.broadcast %cst_53 : f32 to vector<32x256xf32>
    %164 = arith.maximumf %162, %163 : vector<32x256xf32>
    %c0_54 = arith.constant 0 : index
    %c0_55 = arith.constant 0 : index
    %165 = vector.load %arg5[%c0_54, %c0_55] : memref<32x32xbf16, #tpu.memory_space<vmem>>, vector<32x32xbf16>
    %166 = arith.truncf %164 : vector<32x256xf32> to vector<32x256xbf16>
    %cst_56 = arith.constant dense<0.000000e+00> : vector<32x256xf32>
    %167 = tpu.matmul %165, %166, %cst_56 {dimension_numbers = #tpu.dot_dimension_numbers<[1], [0], [0], [1], [0, 0, 1, 1], [], []>} : vector<32x32xbf16>, vector<32x256xbf16>, vector<32x256xf32> -> vector<32x256xf32>
    %c0_57 = arith.constant 0 : index
    %c0_58 = arith.constant 0 : index
    %168 = vector.load %arg6[%c0_57, %c0_58] : memref<32x1xf32, #tpu.memory_space<vmem>>, vector<32x1xf32>
    %169 = vector.broadcast %168 : vector<32x1xf32> to vector<32x256xf32>
    %170 = arith.addf %167, %169 : vector<32x256xf32>
    %cst_59 = arith.constant 0.000000e+00 : f32
    %171 = vector.broadcast %cst_59 : f32 to vector<32x256xf32>
    %172 = arith.maximumf %170, %171 : vector<32x256xf32>
    %c0_60 = arith.constant 0 : index
    %c0_61 = arith.constant 0 : index
    %173 = vector.load %arg7[%c0_60, %c0_61] : memref<1x32xbf16, #tpu.memory_space<vmem>>, vector<1x32xbf16>
    %174 = arith.truncf %172 : vector<32x256xf32> to vector<32x256xbf16>
    %cst_62 = arith.constant dense<0.000000e+00> : vector<1x256xf32>
    %175 = tpu.matmul %173, %174, %cst_62 {dimension_numbers = #tpu.dot_dimension_numbers<[1], [0], [0], [1], [0, 0, 1, 1], [], []>} : vector<1x32xbf16>, vector<32x256xbf16>, vector<1x256xf32> -> vector<1x256xf32>
    %c0_63 = arith.constant 0 : index
    %c0_64 = arith.constant 0 : index
    %176 = vector.load %arg8[%c0_63, %c0_64] : memref<1x1xf32, #tpu.memory_space<vmem>>, vector<1x1xf32>
    %177 = vector.broadcast %176 : vector<1x1xf32> to vector<1x256xf32>
    %178 = arith.addf %175, %177 : vector<1x256xf32>
    %c0_65 = arith.constant 0 : index
    %c0_66 = arith.constant 0 : index
    %179 = vector.load %arg9[%c0_65, %c0_66] : memref<1x256xf32, #tpu.memory_space<vmem>>, vector<1x256xf32>
    tpu.vector_store %arg9[%c0_65, %c0_66], %178 {strides = array<i32>} : memref<1x256xf32, #tpu.memory_space<vmem>>, vector<1x256xf32>,
    return
  }
  func.func @transform_0(%arg0: i32) -> (i32, i32) {
    %c0_i32 = arith.constant 0 : i32
    %c0_i32_0 = arith.constant 0 : i32
    return %c0_i32, %arg0 : i32, i32
  }
  func.func @transform_1(%arg0: i32) -> (i32, i32) {
    %c0_i32 = arith.constant 0 : i32
    %c0_i32_0 = arith.constant 0 : i32
    %c0_i32_1 = arith.constant 0 : i32
    return %c0_i32, %c0_i32_0 : i32, i32
  }
  func.func @transform_2(%arg0: i32) -> (i32, i32, i32) {
    %c0_i32 = arith.constant 0 : i32
    %c0_i32_0 = arith.constant 0 : i32
    %c0_i32_1 = arith.constant 0 : i32
    %c0_i32_2 = arith.constant 0 : i32
    return %c0_i32, %c0_i32_0, %c0_i32_1 : i32, i32, i32
  }
  func.func @transform_3(%arg0: i32) -> (i32, i32, i32) {
    %c0_i32 = arith.constant 0 : i32
    %c0_i32_0 = arith.constant 0 : i32
    %c0_i32_1 = arith.constant 0 : i32
    %c0_i32_2 = arith.constant 0 : i32
    return %c0_i32, %c0_i32_0, %c0_i32_1 : i32, i32, i32
  }
  func.func @transform_4(%arg0: i32) -> (i32, i32) {
    %c0_i32 = arith.constant 0 : i32
    %c0_i32_0 = arith.constant 0 : i32
    %c0_i32_1 = arith.constant 0 : i32
    return %c0_i32, %c0_i32_0 : i32, i32
  }
  func.func @transform_5(%arg0: i32) -> (i32, i32) {
    %c0_i32 = arith.constant 0 : i32
    %c0_i32_0 = arith.constant 0 : i32
    %c0_i32_1 = arith.constant 0 : i32
    return %c0_i32, %c0_i32_0 : i32, i32
  }
  func.func @transform_6(%arg0: i32) -> (i32, i32) {
    %c0_i32 = arith.constant 0 : i32
    %c0_i32_0 = arith.constant 0 : i32
    %c0_i32_1 = arith.constant 0 : i32
    return %c0_i32, %c0_i32_0 : i32, i32
  }
  func.func @transform_7(%arg0: i32) -> (i32, i32) {
    %c0_i32 = arith.constant 0 : i32
    %c0_i32_0 = arith.constant 0 : i32
    %c0_i32_1 = arith.constant 0 : i32
    return %c0_i32, %c0_i32_0 : i32, i32
  }
  func.func @transform_8(%arg0: i32) -> (i32, i32) {
    %c0_i32 = arith.constant 0 : i32
    %c0_i32_0 = arith.constant 0 : i32
    return %c0_i32, %arg0 : i32, i32
  }
}

</mosaic_0001>

<llo_original>
// kernel: tpu_custom_call.1
$region0: #{tpu_custom_call.1}
  #allocation0 [shape = 'u32[]', space=smem, size = 0x4, offset = 0x4, fixed_abs, tag = 'smem constant byte address 0x4 - core index']
  #allocation1 [shape = 'u32[144,128]{1,0:T(1,128)}', space=vmem, size = 0x12000, scoped, tag = 'internal scratch']
  #allocation2 [shape = 'f32[1,1]{1,0:T(1,128)S(1)}', space=vmem, size = 0x200, scoped, tag = 'scoped memory for tpu_custom_call.1']
  %s0 = inlined_call_operand.vmem [shape: f32[8,256], index: 0, kind: input, shape index: {}]
  %s1 = inlined_call_operand.vmem [shape: bf16[32,24], index: 1, kind: input, shape index: {}]
  %s2 = inlined_call_operand.vmem [shape: bf16[4,32,96], index: 2, kind: input, shape index: {}]
  %s3 = inlined_call_operand.vmem [shape: bf16[4,64,16], index: 3, kind: input, shape index: {}]
  %s4 = inlined_call_operand.vmem [shape: bf16[32,32], index: 4, kind: input, shape index: {}]
  %s5 = inlined_call_operand.vmem [shape: f32[32,1], index: 5, kind: input, shape index: {}]
  %s6 = inlined_call_operand.vmem [shape: bf16[1,32], index: 6, kind: input, shape index: {}]
  %s7 = inlined_call_operand.<no memory space> [shape: f32[1,1], index: 7, kind: input, shape index: {}]
  %s8 = inlined_call_operand.hbm [shape: f32[1,256], index: 8, kind: output, shape index: {}]
  %s9 = sld [smem:[#allocation0]]
  $region42: #{tpu_custom_call.1} parent=0
    _
  %s11 = ssub.s32 1, %s9
  %s12 = scalar_select 0, %s11, %s9
  %v13 = vstv %s7
  %14 = vst [vmem:[#allocation2] sm:$0x1] %v13
  $region1: #{tpu_custom_call.1} parent=0
    #allocation3 [shape = 'u8[1024]{0}', space=vmem, size = 0x400, scoped, tag = 'output window, operand 0, single buffered']
    #allocation4 [shape = 's32[1]{0}', space=sflag, size = 0x4, scoped, tag = 'scoped memory for tpu_custom_call.1']
    %15 = vsyncpa [#allocation4], 0
    // Predicated region
    $region2: #{tpu_custom_call.1} parent=1 // pred_check
      _
    $region3: #{tpu_custom_call.1} parent=1 // pred_check_branch
      %17 = sbr.rel (0) target = $region5
    $region4: #{tpu_custom_call.1} parent=1 // pred_region
      _
    $region5: #{tpu_custom_call.1} parent=1 // pred_fallthru
      _
    // Predicated region
    $region6: #{tpu_custom_call.1} parent=1 // pred_check
      _
    $region7: #{tpu_custom_call.1} parent=1 // pred_check_branch
      %19 = sbr.rel (0) target = $region9
    $region8: #{tpu_custom_call.1} parent=1 // pred_region
      _
    $region9: #{tpu_custom_call.1} parent=1 // pred_fallthru
      _
    // Predicated region
    $region10: #{tpu_custom_call.1} parent=1 // pred_check
      _
    $region11: #{tpu_custom_call.1} parent=1 // pred_check_branch
      %21 = sbr.rel (0) target = $region13
    $region12: #{tpu_custom_call.1} parent=1 // pred_region
      _
    $region13: #{tpu_custom_call.1} parent=1 // pred_fallthru
      _
    // Predicated region
    $region14: #{tpu_custom_call.1} parent=1 // pred_check
      _
    $region15: #{tpu_custom_call.1} parent=1 // pred_check_branch
      %23 = sbr.rel (0) target = $region17
    $region16: #{tpu_custom_call.1} parent=1 // pred_region
      _
    $region17: #{tpu_custom_call.1} parent=1 // pred_fallthru
      _
    // Predicated region
    $region18: #{tpu_custom_call.1} parent=1 // pred_check
      _
    $region19: #{tpu_custom_call.1} parent=1 // pred_check_branch
      %25 = sbr.rel (0) target = $region21
    $region20: #{tpu_custom_call.1} parent=1 // pred_region
      _
    $region21: #{tpu_custom_call.1} parent=1 // pred_fallthru
      _
    // Predicated region
    $region22: #{tpu_custom_call.1} parent=1 // pred_check
      _
    $region23: #{tpu_custom_call.1} parent=1 // pred_check_branch
      %27 = sbr.rel (0) target = $region25
    $region24: #{tpu_custom_call.1} parent=1 // pred_region
      _
    $region25: #{tpu_custom_call.1} parent=1 // pred_fallthru
      _
    // Predicated region
    $region26: #{tpu_custom_call.1} parent=1 // pred_check
      _
    $region27: #{tpu_custom_call.1} parent=1 // pred_check_branch
      %29 = sbr.rel (0) target = $region29
    $region28: #{tpu_custom_call.1} parent=1 // pred_region
      _
    $region29: #{tpu_custom_call.1} parent=1 // pred_fallthru
      _
    // Predicated region
    $region30: #{tpu_custom_call.1} parent=1 // pred_check
      _
    $region31: #{tpu_custom_call.1} parent=1 // pred_check_branch
      %31 = sbr.rel (0) target = $region33
    $region32: #{tpu_custom_call.1} parent=1 // pred_region
      _
    $region33: #{tpu_custom_call.1} parent=1 // pred_fallthru
      _
    %v33 = vlaneseq
    %v34 = vand.u32 %v33, 127
    %v35 = vadd.s32 %v34, 128
    %vm36 = vcmp.lt.s32.totalorder %v34, 0
    %v37 = vsub.s32 0, %v34
    %v38 = vsel %vm36, %v37, %v34
    %v39 = vshrl.u32 %v38, 7
    %v40 = vand.u32 %v38, 127
    %v41 = vsub.s32 0, %v40
    %v42 = vsel %vm36, %v41, %v40
    %vm43 = vcmp.lt.s32.totalorder %v35, 0
    %v44 = vsub.s32 0, %v35
    %v45 = vsel %vm43, %v44, %v35
    %v46 = vshrl.u32 %v45, 7
    %v47 = vand.u32 %v45, 127
    %v48 = vsub.s32 0, %v47
    %v49 = vsel %vm43, %v48, %v47
    %vm50 = vcmp.ne.s32.totalorder %v42, 0
    %vm51 = vcmp.ne.s32.totalorder %v49, 0
    %vm52 = vcmp.lt.s32.totalorder %v42, 0
    %vm53 = vcmp.lt.s32.totalorder %v49, 0
    %vm54 = vmand %vm52, %vm50
    %vm55 = vmand %vm53, %vm51
    %v56 = vadd.s32 %v42, 128
    %v57 = vadd.s32 %v49, 128
    %v58 = vsel %vm54, %v56, %v42
    %v59 = vsel %vm55, %v57, %v49
    %vm60 = vcmp.ge.s32.totalorder %v58, 1
    %vm61 = vcmp.ge.s32.totalorder %v59, 1
    %v62 = vsel %vm60, 1, 0
    %v63 = vsel %vm61, 1, 0
    %v64 = vcvt.s32.f32 %v62
    %v65 = vcvt.s32.f32 %v63
    %vm66 = vcmp.lt.s32.totalorder %v58, 127
    %vm67 = vcmp.lt.s32.totalorder %v59, 127
    %v68 = vsel %vm66, 1, 0
    %v69 = vsel %vm67, 1, 0
    %v70 = vcvt.s32.f32 %v68
    %v71 = vcvt.s32.f32 %v69
    %vm72 = vcmp.ge.s32.totalorder %v58, 2
    %vm73 = vcmp.ge.s32.totalorder %v59, 2
    %v74 = vsel %vm72, 1, 0
    %v75 = vsel %vm73, 1, 0
    %v76 = vcvt.s32.f32 %v74
    %v77 = vcvt.s32.f32 %v75
    %vm78 = vcmp.lt.s32.totalorder %v58, 126
    %vm79 = vcmp.lt.s32.totalorder %v59, 126
    %v80 = vsel %vm78, 1, 0
    %v81 = vsel %vm79, 1, 0
    %v82 = vcvt.s32.f32 %v80
    %v83 = vcvt.s32.f32 %v81
    %v84 = vld [vmem:[%s1] sm:$0xf]
    %v85 = vld [vmem:[%s1 + $0x4] sm:$0xf]
    %v86 = vld [vmem:[%s1 + $0x8] sm:$0xf]
    %v87 = vld [vmem:[%s1 + $0xc] sm:$0xf]
    %v88 = vld [vmem:[%s0] sm:$0xff]
    %v89 = vld [vmem:[%s0 + $0x8] sm:$0xff]
    %90 = vrot.lane.b32.xlu0 %v88, 1
    %v91 = vpop.permute.xlu0 %90
    %92 = vrot.lane.b32.xlu0 %v89, 1
    %v93 = vpop.permute.xlu0 %92
    %vm94 = vcmp.lt.s32.totalorder %v34, 1
    %v95 = vsel %vm94, %v91, %v93
    %v96 = vsel %vm94, %v93, %v91
    %v97 = vmul.f32 %v96, %v64
    %v98 = vmul.f32 %v95, %v65
    %99 = vrot.lane.b32.xlu0 %v88, 127
    %v100 = vpop.permute.xlu0 %99
    %101 = vrot.lane.b32.xlu0 %v89, 127
    %v102 = vpop.permute.xlu0 %101
    %vm103 = vcmp.lt.s32.totalorder %v34, 127
    %v104 = vsel %vm103, %v100, %v102
    %v105 = vsel %vm103, %v102, %v100
    %v106 = vmul.f32 %v104, %v70
    %v107 = vmul.f32 %v105, %v71
    %v108 = vpack.c.bf16 %v88, %v97
    %v109 = vpack.c.bf16 %v89, %v98
    %v110 = vpack.c.bf16 %v106, %v106
    %v111 = vpack.c.bf16 %v107, %v107
    %v116 = vunpack.c.l.b16 %v84
    %v117 = vunpack.c.l.b16 %v85
    %v118 = vunpack.c.l.b16 %v86
    %v119 = vunpack.c.l.b16 %v87
    %v120 = vpack.c.b16 %v117, %v116
    %v121 = vpack.c.b16 %v119, %v118
    %vm122 = vcmask 195584
    %v124 = vsel %vm122, %v120, 0
    %v127 = vsel %vm122, %v121, 0
    %vm129 = vcmask 1043456
    %v131 = vsel %vm129, %v110, 0
    %v134 = vsel %vm129, %v111, 0
    %136 = vmatprep.subr.bf16.mxu0 %v109
    %137 = vmatpush1.bf16.msra.mxu0 %v108
    %138 = vmatprep.subr.bf16.mxu0 %v134
    %139 = vmatpush1.bf16.msra.mxu0 %v131
    %140 = vmatprep.subr.bf16.mxu0 0
    %141 = vmatpush1.bf16.msra.mxu0 0
    %142 = vmatprep.subr.bf16.mxu0 0
    %143 = vmatpush1.bf16.msra.mxu0 0
    %144 = vmatprep.subr.bf16.mxu0 0
    %145 = vmatpush1.bf16.msra.mxu0 0
    %146 = vmatprep.subr.bf16.mxu0 0
    %147 = vmatpush1.bf16.msra.mxu0 0
    %148 = vmatprep.subr.bf16.mxu0 0
    %149 = vmatpush1.bf16.msra.mxu0 0
    %150 = vmatprep.subr.bf16.mxu0 0
    %151 = vmatpush1.bf16.msra.mxu0 0
    %152 = vmatprep.subr.bf16.mxu0 0
    %153 = vmatpush1.bf16.msra.mxu0 0
    %154 = vmatprep.subr.bf16.mxu0 0
    %155 = vmatpush1.bf16.msra.mxu0 0
    %156 = vmatprep.subr.bf16.mxu0 0
    %157 = vmatpush1.bf16.msra.mxu0 0
    %158 = vmatprep.subr.bf16.mxu0 0
    %159 = vmatpush1.bf16.msra.mxu0 0
    %160 = vmatprep.subr.bf16.mxu0 0
    %161 = vmatpush1.bf16.msra.mxu0 0
    %162 = vmatprep.subr.bf16.mxu0 0
    %163 = vmatpush1.bf16.msra.mxu0 0
    %164 = vmatprep.subr.bf16.mxu0 0
    %165 = vmatpush1.bf16.msra.mxu0 0
    %166 = vmatprep.subr.bf16.mxu0 0
    %167 = vmatpush1.bf16.msra.mxu0 0
    %168 = vmatprep.mubr.bf16.mxu0 0
    %169 = vmatmul.mubr.bf16.gmra.mrb[0].mxu0 %v124
    %v170 = vpop.f32.mrb[0].mxu0
    %v171 = vadd.f32 0.0, %v170
    %v172 = vpop.f32.mrb[0].mxu0
    %v173 = vadd.f32 0.0, %v172
    %v174 = vpop.f32.mrb[0].mxu0
    %v175 = vadd.f32 0.0, %v174
    %v176 = vpop.f32.mrb[0].mxu0
    %v177 = vadd.f32 0.0, %v176
    %178 = vmatprep.mubr.bf16.mxu0 0
    %179 = vmatmul.mubr.bf16.gmra.mrb[0].mxu0 %v127
    %v180 = vpop.f32.mrb[0].mxu0
    %v181 = vadd.f32 0.0, %v180
    %v182 = vpop.f32.mrb[0].mxu0
    %v183 = vadd.f32 0.0, %v182
    %v184 = vpop.f32.mrb[0].mxu0
    %v185 = vadd.f32 0.0, %v184
    %v186 = vpop.f32.mrb[0].mxu0
    %v187 = vadd.f32 0.0, %v186
    %188 = vdwg.mxu0
    %v189 = vld [vmem:[%s2] sm:$0xf]
    %v190 = vld [vmem:[%s2 + $0x4] sm:$0xf]
    %v191 = vld [vmem:[%s2 + $0x8] sm:$0xf]
    %v192 = vld [vmem:[%s2 + $0xc] sm:$0xf]
    %193 = vrot.lane.b32.xlu0 %v171, 1
    %v194 = vpop.permute.xlu0 %193
    %195 = vrot.lane.b32.xlu0 %v175, 1
    %v196 = vpop.permute.xlu0 %195
    %197 = vrot.lane.b32.xlu0 %v181, 1
    %v198 = vpop.permute.xlu0 %197
    %199 = vrot.lane.b32.xlu0 %v185, 1
    %v200 = vpop.permute.xlu0 %199
    %201 = vrot.lane.b32.xlu0 %v173, 1
    %v202 = vpop.permute.xlu0 %201
    %203 = vrot.lane.b32.xlu0 %v177, 1
    %v204 = vpop.permute.xlu0 %203
    %205 = vrot.lane.b32.xlu0 %v183, 1
    %v206 = vpop.permute.xlu0 %205
    %207 = vrot.lane.b32.xlu0 %v187, 1
    %v208 = vpop.permute.xlu0 %207
    %v209 = vsel %vm94, %v194, %v202
    %v210 = vsel %vm94, %v196, %v204
    %v211 = vsel %vm94, %v198, %v206
    %v212 = vsel %vm94, %v200, %v208
    %v213 = vsel %vm94, %v202, %v194
    %v214 = vsel %vm94, %v204, %v196
    %v215 = vsel %vm94, %v206, %v198
    %v216 = vsel %vm94, %v208, %v200
    %v217 = vmul.f32 %v213, %v64
    %v218 = vmul.f32 %v209, %v65
    %v219 = vmul.f32 %v214, %v64
    %v220 = vmul.f32 %v210, %v65
    %v221 = vmul.f32 %v215, %v64
    %v222 = vmul.f32 %v211, %v65
    %v223 = vmul.f32 %v216, %v64
    %v224 = vmul.f32 %v212, %v65
    %225 = vrot.lane.b32.xlu0 %v171, 127
    %v226 = vpop.permute.xlu0 %225
    %227 = vrot.lane.b32.xlu0 %v175, 127
    %v228 = vpop.permute.xlu0 %227
    %229 = vrot.lane.b32.xlu0 %v181, 127
    %v230 = vpop.permute.xlu0 %229
    %231 = vrot.lane.b32.xlu0 %v185, 127
    %v232 = vpop.permute.xlu0 %231
    %233 = vrot.lane.b32.xlu0 %v173, 127
    %v234 = vpop.permute.xlu0 %233
    %235 = vrot.lane.b32.xlu0 %v177, 127
    %v236 = vpop.permute.xlu0 %235
    %237 = vrot.lane.b32.xlu0 %v183, 127
    %v238 = vpop.permute.xlu0 %237
    %239 = vrot.lane.b32.xlu0 %v187, 127
    %v240 = vpop.permute.xlu0 %239
    %v241 = vsel %vm103, %v226, %v234
    %v242 = vsel %vm103, %v228, %v236
    %v243 = vsel %vm103, %v230, %v238
    %v244 = vsel %vm103, %v232, %v240
    %v245 = vsel %vm103, %v234, %v226
    %v246 = vsel %vm103, %v236, %v228
    %v247 = vsel %vm103, %v238, %v230
    %v248 = vsel %vm103, %v240, %v232
    %v249 = vmul.f32 %v241, %v70
    %v250 = vmul.f32 %v245, %v71
    %v251 = vmul.f32 %v242, %v70
    %v252 = vmul.f32 %v246, %v71
    %v253 = vmul.f32 %v243, %v70
    %v254 = vmul.f32 %v247, %v71
    %v255 = vmul.f32 %v244, %v70
    %v256 = vmul.f32 %v248, %v71
    %v257 = vpack.c.bf16 %v219, %v217
    %v258 = vpack.c.bf16 %v220, %v218
    %v259 = vpack.c.bf16 %v223, %v221
    %v260 = vpack.c.bf16 %v224, %v222
    %v261 = vpack.c.bf16 %v175, %v171
    %v262 = vpack.c.bf16 %v177, %v173
    %v263 = vpack.c.bf16 %v185, %v181
    %v264 = vpack.c.bf16 %v187, %v183
    %v265 = vpack.c.bf16 %v251, %v249
    %v266 = vpack.c.bf16 %v252, %v250
    %v267 = vpack.c.bf16 %v255, %v253
    %v268 = vpack.c.bf16 %v256, %v254
    %v273 = vunpack.c.l.b16 %v189
    %v274 = vunpack.c.l.b16 %v190
    %v275 = vunpack.c.l.b16 %v191
    %v276 = vunpack.c.l.b16 %v192
    %v277 = vpack.c.b16 %v274, %v273
    %v278 = vpack.c.b16 %v276, %v275
    %vm279 = vcmask 785408
    %v281 = vsel %vm279, %v277, 0
    %v284 = vsel %vm279, %v278, 0
    %286 = vmatprep.subr.bf16.mxu0 %v258
    %287 = vmatpush1.bf16.msra.mxu0 %v257
    %288 = vmatprep.subr.bf16.mxu0 %v260
    %289 = vmatpush1.bf16.msra.mxu0 %v259
    %290 = vmatprep.subr.bf16.mxu0 %v262
    %291 = vmatpush1.bf16.msra.mxu0 %v261
    %292 = vmatprep.subr.bf16.mxu0 %v264
    %293 = vmatpush1.bf16.msra.mxu0 %v263
    %294 = vmatprep.subr.bf16.mxu0 %v266
    %295 = vmatpush1.bf16.msra.mxu0 %v265
    %296 = vmatprep.subr.bf16.mxu0 %v268
    %297 = vmatpush1.bf16.msra.mxu0 %v267
    %298 = vmatprep.subr.bf16.mxu0 0
    %299 = vmatpush1.bf16.msra.mxu0 0
    %300 = vmatprep.subr.bf16.mxu0 0
    %301 = vmatpush1.bf16.msra.mxu0 0
    %302 = vmatprep.subr.bf16.mxu0 0
    %303 = vmatpush1.bf16.msra.mxu0 0
    %304 = vmatprep.subr.bf16.mxu0 0
    %305 = vmatpush1.bf16.msra.mxu0 0
    %306 = vmatprep.subr.bf16.mxu0 0
    %307 = vmatpush1.bf16.msra.mxu0 0
    %308 = vmatprep.subr.bf16.mxu0 0
    %309 = vmatpush1.bf16.msra.mxu0 0
    %310 = vmatprep.subr.bf16.mxu0 0
    %311 = vmatpush1.bf16.msra.mxu0 0
    %312 = vmatprep.subr.bf16.mxu0 0
    %313 = vmatpush1.bf16.msra.mxu0 0
    %314 = vmatprep.subr.bf16.mxu0 0
    %315 = vmatpush1.bf16.msra.mxu0 0
    %316 = vmatprep.subr.bf16.mxu0 0
    %317 = vmatpush1.bf16.msra.mxu0 0
    %318 = vmatprep.mubr.bf16.mxu0 0
    %319 = vmatmul.mubr.bf16.gmra.mrb[0].mxu0 %v281
    %v320 = vpop.f32.mrb[0].mxu0
    %v321 = vadd.f32 0.0, %v320
    %v322 = vpop.f32.mrb[0].mxu0
    %v323 = vadd.f32 0.0, %v322
    %v324 = vpop.f32.mrb[0].mxu0
    %v325 = vadd.f32 0.0, %v324
    %v326 = vpop.f32.mrb[0].mxu0
    %v327 = vadd.f32 0.0, %v326
    %328 = vmatprep.mubr.bf16.mxu0 0
    %329 = vmatmul.mubr.bf16.gmra.mrb[0].mxu0 %v284
    %v330 = vpop.f32.mrb[0].mxu0
    %v331 = vadd.f32 0.0, %v330
    %v332 = vpop.f32.mrb[0].mxu0
    %v333 = vadd.f32 0.0, %v332
    %v334 = vpop.f32.mrb[0].mxu0
    %v335 = vadd.f32 0.0, %v334
    %v336 = vpop.f32.mrb[0].mxu0
    %v337 = vadd.f32 0.0, %v336
    %338 = vdwg.mxu0
    %v339 = vtanh.pop %v321
    %v340 = vtanh.pop %v323
    %v341 = vtanh.pop %v325
    %v342 = vtanh.pop %v327
    %v343 = vxor.u32 %v331, 2147483648
    %v344 = vxor.u32 %v333, 2147483648
    %v345 = vxor.u32 %v335, 2147483648
    %v346 = vxor.u32 %v337, 2147483648
    %v347 = vmul.f32 %v343, 1.442695
    %v348 = vpow.pop %v347
    %v349 = vmul.f32 %v344, 1.442695
    %v350 = vpow.pop %v349
    %v351 = vmul.f32 %v345, 1.442695
    %v352 = vpow.pop %v351
    %v353 = vmul.f32 %v346, 1.442695
    %v354 = vpow.pop %v353
    %v355 = vadd.f32 %v348, 1.0
    %v356 = vadd.f32 %v350, 1.0
    %v357 = vadd.f32 %v352, 1.0
    %v358 = vadd.f32 %v354, 1.0
    %v359 = vrcp.pop %v355
    %v360 = vmul.f32 1.0, %v359
    %v361 = vrcp.pop %v356
    %v362 = vmul.f32 1.0, %v361
    %v363 = vrcp.pop %v357
    %v364 = vmul.f32 1.0, %v363
    %v365 = vrcp.pop %v358
    %v366 = vmul.f32 1.0, %v365
    %v367 = vmul.f32 %v339, %v360
    %v368 = vmul.f32 %v340, %v362
    %v369 = vmul.f32 %v341, %v364
    %v370 = vmul.f32 %v342, %v366
    %v371 = vld [vmem:[%s3] sm:$0xf]
    %v372 = vld [vmem:[%s3 + $0x4] sm:$0xf]
    %v373 = vld [vmem:[%s3 + $0x8] sm:$0xf]
    %v374 = vld [vmem:[%s3 + $0xc] sm:$0xf]
    %v375 = vld [vmem:[%s3 + $0x10] sm:$0xf]
    %v376 = vld [vmem:[%s3 + $0x14] sm:$0xf]
    %v377 = vld [vmem:[%s3 + $0x18] sm:$0xf]
    %v378 = vld [vmem:[%s3 + $0x1c] sm:$0xf]
    %v379 = vpack.c.bf16 %v369, %v367
    %v380 = vpack.c.bf16 %v370, %v368
    %v389 = vunpack.c.l.b16 %v371
    %v390 = vunpack.c.l.b16 %v372
    %v391 = vunpack.c.l.b16 %v373
    %v392 = vunpack.c.l.b16 %v374
    %v393 = vunpack.c.l.b16 %v375
    %v394 = vunpack.c.l.b16 %v376
    %v395 = vunpack.c.l.b16 %v377
    %v396 = vunpack.c.l.b16 %v378
    %v397 = vpack.c.b16 %v390, %v389
    %v398 = vpack.c.b16 %v392, %v391
    %v399 = vpack.c.b16 %v394, %v393
    %v400 = vpack.c.b16 %v396, %v395
    %vm401 = vcmask 130048
    %v403 = vsel %vm401, %v397, 0
    %v406 = vsel %vm401, %v398, 0
    %v409 = vsel %vm401, %v399, 0
    %v412 = vsel %vm401, %v400, 0
    %414 = vmatprep.subr.bf16.mxu0 %v380
    %415 = vmatpush1.bf16.msra.mxu0 %v379
    %416 = vmatprep.subr.bf16.mxu0 0
    %417 = vmatpush1.bf16.msra.mxu0 0
    %418 = vmatprep.subr.bf16.mxu0 0
    %419 = vmatpush1.bf16.msra.mxu0 0
    %420 = vmatprep.subr.bf16.mxu0 0
    %421 = vmatpush1.bf16.msra.mxu0 0
    %422 = vmatprep.subr.bf16.mxu0 0
    %423 = vmatpush1.bf16.msra.mxu0 0
    %424 = vmatprep.subr.bf16.mxu0 0
    %425 = vmatpush1.bf16.msra.mxu0 0
    %426 = vmatprep.subr.bf16.mxu0 0
    %427 = vmatpush1.bf16.msra.mxu0 0
    %428 = vmatprep.subr.bf16.mxu0 0
    %429 = vmatpush1.bf16.msra.mxu0 0
    %430 = vmatprep.subr.bf16.mxu0 0
    %431 = vmatpush1.bf16.msra.mxu0 0
    %432 = vmatprep.subr.bf16.mxu0 0
    %433 = vmatpush1.bf16.msra.mxu0 0
    %434 = vmatprep.subr.bf16.mxu0 0
    %435 = vmatpush1.bf16.msra.mxu0 0
    %436 = vmatprep.subr.bf16.mxu0 0
    %437 = vmatpush1.bf16.msra.mxu0 0
    %438 = vmatprep.subr.bf16.mxu0 0
    %439 = vmatpush1.bf16.msra.mxu0 0
    %440 = vmatprep.subr.bf16.mxu0 0
    %441 = vmatpush1.bf16.msra.mxu0 0
    %442 = vmatprep.subr.bf16.mxu0 0
    %443 = vmatpush1.bf16.msra.mxu0 0
    %444 = vmatprep.subr.bf16.mxu0 0
    %445 = vmatpush1.bf16.msra.mxu0 0
    %446 = vmatprep.mubr.bf16.mxu0 0
    %447 = vmatmul.mubr.bf16.gmra.mrb[0].mxu0 %v403
    %v448 = vpop.f32.mrb[0].mxu0
    %v449 = vadd.f32 0.0, %v448
    %v450 = vpop.f32.mrb[0].mxu0
    %v451 = vadd.f32 0.0, %v450
    %v452 = vpop.f32.mrb[0].mxu0
    %v453 = vadd.f32 0.0, %v452
    %v454 = vpop.f32.mrb[0].mxu0
    %v455 = vadd.f32 0.0, %v454
    %456 = vmatprep.mubr.bf16.mxu0 0
    %457 = vmatmul.mubr.bf16.gmra.mrb[0].mxu0 %v406
    %v458 = vpop.f32.mrb[0].mxu0
    %v459 = vadd.f32 0.0, %v458
    %v460 = vpop.f32.mrb[0].mxu0
    %v461 = vadd.f32 0.0, %v460
    %v462 = vpop.f32.mrb[0].mxu0
    %v463 = vadd.f32 0.0, %v462
    %v464 = vpop.f32.mrb[0].mxu0
    %v465 = vadd.f32 0.0, %v464
    %466 = vmatprep.mubr.bf16.mxu0 0
    %467 = vmatmul.mubr.bf16.gmra.mrb[0].mxu0 %v409
    %v468 = vpop.f32.mrb[0].mxu0
    %v469 = vadd.f32 0.0, %v468
    %v470 = vpop.f32.mrb[0].mxu0
    %v471 = vadd.f32 0.0, %v470
    %v472 = vpop.f32.mrb[0].mxu0
    %v473 = vadd.f32 0.0, %v472
    %v474 = vpop.f32.mrb[0].mxu0
    %v475 = vadd.f32 0.0, %v474
    %476 = vmatprep.mubr.bf16.mxu0 0
    %477 = vmatmul.mubr.bf16.gmra.mrb[0].mxu0 %v412
    %v478 = vpop.f32.mrb[0].mxu0
    %v479 = vadd.f32 0.0, %v478
    %v480 = vpop.f32.mrb[0].mxu0
    %v481 = vadd.f32 0.0, %v480
    %v482 = vpop.f32.mrb[0].mxu0
    %v483 = vadd.f32 0.0, %v482
    %v484 = vpop.f32.mrb[0].mxu0
    %v485 = vadd.f32 0.0, %v484
    %486 = vdwg.mxu0
    %v487 = vadd.f32 %v449, 0.0
    %v488 = vadd.f32 %v451, 0.0
    %v489 = vadd.f32 %v453, 0.0
    %v490 = vadd.f32 %v455, 0.0
    %v491 = vadd.f32 %v459, 0.0
    %v492 = vadd.f32 %v461, 0.0
    %v493 = vadd.f32 %v463, 0.0
    %v494 = vadd.f32 %v465, 0.0
    %v495 = vadd.f32 %v469, %v171
    %v496 = vadd.f32 %v471, %v173
    %v497 = vadd.f32 %v473, %v175
    %v498 = vadd.f32 %v475, %v177
    %v499 = vadd.f32 %v479, %v181
    %v500 = vadd.f32 %v481, %v183
    %v501 = vadd.f32 %v483, %v185
    %v502 = vadd.f32 %v485, %v187
    %v503 = vmul.f32 %v495, 0.70710677
    %v504 = vmul.f32 %v496, 0.70710677
    %v505 = vmul.f32 %v497, 0.70710677
    %v506 = vmul.f32 %v498, 0.70710677
    %v507 = vmul.f32 %v499, 0.70710677
    %v508 = vmul.f32 %v500, 0.70710677
    %v509 = vmul.f32 %v501, 0.70710677
    %v510 = vmul.f32 %v502, 0.70710677
    %s511 = scalar_lea.vmem %s2, 16
    %v512 = vld [vmem:[%s511] sm:$0xf]
    %v513 = vld [vmem:[%s511 + $0x4] sm:$0xf]
    %v514 = vld [vmem:[%s511 + $0x8] sm:$0xf]
    %v515 = vld [vmem:[%s511 + $0xc] sm:$0xf]
    %516 = vrot.lane.b32.xlu0 %v503, 2
    %v517 = vpop.permute.xlu0 %516
    %518 = vrot.lane.b32.xlu0 %v505, 2
    %v519 = vpop.permute.xlu0 %518
    %520 = vrot.lane.b32.xlu0 %v507, 2
    %v521 = vpop.permute.xlu0 %520
    %522 = vrot.lane.b32.xlu0 %v509, 2
    %v523 = vpop.permute.xlu0 %522
    %524 = vrot.lane.b32.xlu0 %v504, 2
    %v525 = vpop.permute.xlu0 %524
    %526 = vrot.lane.b32.xlu0 %v506, 2
    %v527 = vpop.permute.xlu0 %526
    %528 = vrot.lane.b32.xlu0 %v508, 2
    %v529 = vpop.permute.xlu0 %528
    %530 = vrot.lane.b32.xlu0 %v510, 2
    %v531 = vpop.permute.xlu0 %530
    %vm532 = vcmp.lt.s32.totalorder %v34, 2
    %v533 = vsel %vm532, %v517, %v525
    %v534 = vsel %vm532, %v519, %v527
    %v535 = vsel %vm532, %v521, %v529
    %v536 = vsel %vm532, %v523, %v531
    %v537 = vsel %vm532, %v525, %v517
    %v538 = vsel %vm532, %v527, %v519
    %v539 = vsel %vm532, %v529, %v521
    %v540 = vsel %vm532, %v531, %v523
    %v541 = vmul.f32 %v537, %v76
    %v542 = vmul.f32 %v533, %v77
    %v543 = vmul.f32 %v538, %v76
    %v544 = vmul.f32 %v534, %v77
    %v545 = vmul.f32 %v539, %v76
    %v546 = vmul.f32 %v535, %v77
    %v547 = vmul.f32 %v540, %v76
    %v548 = vmul.f32 %v536, %v77
    %549 = vrot.lane.b32.xlu0 %v503, 126
    %v550 = vpop.permute.xlu0 %549
    %551 = vrot.lane.b32.xlu0 %v505, 126
    %v552 = vpop.permute.xlu0 %551
    %553 = vrot.lane.b32.xlu0 %v507, 126
    %v554 = vpop.permute.xlu0 %553
    %555 = vrot.lane.b32.xlu0 %v509, 126
    %v556 = vpop.permute.xlu0 %555
    %557 = vrot.lane.b32.xlu0 %v504, 126
    %v558 = vpop.permute.xlu0 %557
    %559 = vrot.lane.b32.xlu0 %v506, 126
    %v560 = vpop.permute.xlu0 %559
    %561 = vrot.lane.b32.xlu0 %v508, 126
    %v562 = vpop.permute.xlu0 %561
    %563 = vrot.lane.b32.xlu0 %v510, 126
    %v564 = vpop.permute.xlu0 %563
    %vm565 = vcmp.lt.s32.totalorder %v34, 126
    %v566 = vsel %vm565, %v550, %v558
    %v567 = vsel %vm565, %v552, %v560
    %v568 = vsel %vm565, %v554, %v562
    %v569 = vsel %vm565, %v556, %v564
    %v570 = vsel %vm565, %v558, %v550
    %v571 = vsel %vm565, %v560, %v552
    %v572 = vsel %vm565, %v562, %v554
    %v573 = vsel %vm565, %v564, %v556
    %v574 = vmul.f32 %v566, %v82
    %v575 = vmul.f32 %v570, %v83
    %v576 = vmul.f32 %v567, %v82
    %v577 = vmul.f32 %v571, %v83
    %v578 = vmul.f32 %v568, %v82
    %v579 = vmul.f32 %v572, %v83
    %v580 = vmul.f32 %v569, %v82
    %v581 = vmul.f32 %v573, %v83
    %v582 = vpack.c.bf16 %v543, %v541
    %v583 = vpack.c.bf16 %v544, %v542
    %v584 = vpack.c.bf16 %v547, %v545
    %v585 = vpack.c.bf16 %v548, %v546
    %v586 = vpack.c.bf16 %v505, %v503
    %v587 = vpack.c.bf16 %v506, %v504
    %v588 = vpack.c.bf16 %v509, %v507
    %v589 = vpack.c.bf16 %v510, %v508
    %v590 = vpack.c.bf16 %v576, %v574
    %v591 = vpack.c.bf16 %v577, %v575
    %v592 = vpack.c.bf16 %v580, %v578
    %v593 = vpack.c.bf16 %v581, %v579
    %v598 = vunpack.c.l.b16 %v512
    %v599 = vunpack.c.l.b16 %v513
    %v600 = vunpack.c.l.b16 %v514
    %v601 = vunpack.c.l.b16 %v515
    %v602 = vpack.c.b16 %v599, %v598
    %v603 = vpack.c.b16 %v601, %v600
    %v605 = vsel %vm279, %v602, 0
    %v608 = vsel %vm279, %v603, 0
    %610 = vmatprep.subr.bf16.mxu0 %v583
    %611 = vmatpush1.bf16.msra.mxu0 %v582
    %612 = vmatprep.subr.bf16.mxu0 %v585
    %613 = vmatpush1.bf16.msra.mxu0 %v584
    %614 = vmatprep.subr.bf16.mxu0 %v587
    %615 = vmatpush1.bf16.msra.mxu0 %v586
    %616 = vmatprep.subr.bf16.mxu0 %v589
    %617 = vmatpush1.bf16.msra.mxu0 %v588
    %618 = vmatprep.subr.bf16.mxu0 %v591
    %619 = vmatpush1.bf16.msra.mxu0 %v590
    %620 = vmatprep.subr.bf16.mxu0 %v593
    %621 = vmatpush1.bf16.msra.mxu0 %v592
    %622 = vmatprep.subr.bf16.mxu0 0
    %623 = vmatpush1.bf16.msra.mxu0 0
    %624 = vmatprep.subr.bf16.mxu0 0
    %625 = vmatpush1.bf16.msra.mxu0 0
    %626 = vmatprep.subr.bf16.mxu0 0
    %627 = vmatpush1.bf16.msra.mxu0 0
    %628 = vmatprep.subr.bf16.mxu0 0
    %629 = vmatpush1.bf16.msra.mxu0 0
    %630 = vmatprep.subr.bf16.mxu0 0
    %631 = vmatpush1.bf16.msra.mxu0 0
    %632 = vmatprep.subr.bf16.mxu0 0
    %633 = vmatpush1.bf16.msra.mxu0 0
    %634 = vmatprep.subr.bf16.mxu0 0
    %635 = vmatpush1.bf16.msra.mxu0 0
    %636 = vmatprep.subr.bf16.mxu0 0
    %637 = vmatpush1.bf16.msra.mxu0 0
    %638 = vmatprep.subr.bf16.mxu0 0
    %639 = vmatpush1.bf16.msra.mxu0 0
    %640 = vmatprep.subr.bf16.mxu0 0
    %641 = vmatpush1.bf16.msra.mxu0 0
    %642 = vmatprep.mubr.bf16.mxu0 0
    %643 = vmatmul.mubr.bf16.gmra.mrb[0].mxu0 %v605
    %v644 = vpop.f32.mrb[0].mxu0
    %v645 = vadd.f32 0.0, %v644
    %v646 = vpop.f32.mrb[0].mxu0
    %v647 = vadd.f32 0.0, %v646
    %v648 = vpop.f32.mrb[0].mxu0
    %v649 = vadd.f32 0.0, %v648
    %v650 = vpop.f32.mrb[0].mxu0
    %v651 = vadd.f32 0.0, %v650
    %652 = vmatprep.mubr.bf16.mxu0 0
    %653 = vmatmul.mubr.bf16.gmra.mrb[0].mxu0 %v608
    %v654 = vpop.f32.mrb[0].mxu0
    %v655 = vadd.f32 0.0, %v654
    %v656 = vpop.f32.mrb[0].mxu0
    %v657 = vadd.f32 0.0, %v656
    %v658 = vpop.f32.mrb[0].mxu0
    %v659 = vadd.f32 0.0, %v658
    %v660 = vpop.f32.mrb[0].mxu0
    %v661 = vadd.f32 0.0, %v660
    %662 = vdwg.mxu0
    %v663 = vtanh.pop %v645
    %v664 = vtanh.pop %v647
    %v665 = vtanh.pop %v649
    %v666 = vtanh.pop %v651
    %v667 = vxor.u32 %v655, 2147483648
    %v668 = vxor.u32 %v657, 2147483648
    %v669 = vxor.u32 %v659, 2147483648
    %v670 = vxor.u32 %v661, 2147483648
    %v671 = vmul.f32 %v667, 1.442695
    %v672 = vpow.pop %v671
    %v673 = vmul.f32 %v668, 1.442695
    %v674 = vpow.pop %v673
    %v675 = vmul.f32 %v669, 1.442695
    %v676 = vpow.pop %v675
    %v677 = vmul.f32 %v670, 1.442695
    %v678 = vpow.pop %v677
    %v679 = vadd.f32 %v672, 1.0
    %v680 = vadd.f32 %v674, 1.0
    %v681 = vadd.f32 %v676, 1.0
    %v682 = vadd.f32 %v678, 1.0
    %v683 = vrcp.pop %v679
    %v684 = vmul.f32 1.0, %v683
    %v685 = vrcp.pop %v680
    %v686 = vmul.f32 1.0, %v685
    %v687 = vrcp.pop %v681
    %v688 = vmul.f32 1.0, %v687
    %v689 = vrcp.pop %v682
    %v690 = vmul.f32 1.0, %v689
    %v691 = vmul.f32 %v663, %v684
    %v692 = vmul.f32 %v664, %v686
    %v693 = vmul.f32 %v665, %v688
    %v694 = vmul.f32 %v666, %v690
    %s695 = scalar_lea.vmem %s3, 32
    %v696 = vld [vmem:[%s695] sm:$0xf]
    %v697 = vld [vmem:[%s695 + $0x4] sm:$0xf]
    %v698 = vld [vmem:[%s695 + $0x8] sm:$0xf]
    %v699 = vld [vmem:[%s695 + $0xc] sm:$0xf]
    %v700 = vld [vmem:[%s695 + $0x10] sm:$0xf]
    %v701 = vld [vmem:[%s695 + $0x14] sm:$0xf]
    %v702 = vld [vmem:[%s695 + $0x18] sm:$0xf]
    %v703 = vld [vmem:[%s695 + $0x1c] sm:$0xf]
    %v704 = vpack.c.bf16 %v693, %v691
    %v705 = vpack.c.bf16 %v694, %v692
    %v714 = vunpack.c.l.b16 %v696
    %v715 = vunpack.c.l.b16 %v697
    %v716 = vunpack.c.l.b16 %v698
    %v717 = vunpack.c.l.b16 %v699
    %v718 = vunpack.c.l.b16 %v700
    %v719 = vunpack.c.l.b16 %v701
    %v720 = vunpack.c.l.b16 %v702
    %v721 = vunpack.c.l.b16 %v703
    %v722 = vpack.c.b16 %v715, %v714
    %v723 = vpack.c.b16 %v717, %v716
    %v724 = vpack.c.b16 %v719, %v718
    %v725 = vpack.c.b16 %v721, %v720
    %v727 = vsel %vm401, %v722, 0
    %v730 = vsel %vm401, %v723, 0
    %v733 = vsel %vm401, %v724, 0
    %v736 = vsel %vm401, %v725, 0
    %738 = vmatprep.subr.bf16.mxu0 %v705
    %739 = vmatpush1.bf16.msra.mxu0 %v704
    %740 = vmatprep.subr.bf16.mxu0 0
    %741 = vmatpush1.bf16.msra.mxu0 0
    %742 = vmatprep.subr.bf16.mxu0 0
    %743 = vmatpush1.bf16.msra.mxu0 0
    %744 = vmatprep.subr.bf16.mxu0 0
    %745 = vmatpush1.bf16.msra.mxu0 0
    %746 = vmatprep.subr.bf16.mxu0 0
    %747 = vmatpush1.bf16.msra.mxu0 0
    %748 = vmatprep.subr.bf16.mxu0 0
    %749 = vmatpush1.bf16.msra.mxu0 0
    %750 = vmatprep.subr.bf16.mxu0 0
    %751 = vmatpush1.bf16.msra.mxu0 0
    %752 = vmatprep.subr.bf16.mxu0 0
    %753 = vmatpush1.bf16.msra.mxu0 0
    %754 = vmatprep.subr.bf16.mxu0 0
    %755 = vmatpush1.bf16.msra.mxu0 0
    %756 = vmatprep.subr.bf16.mxu0 0
    %757 = vmatpush1.bf16.msra.mxu0 0
    %758 = vmatprep.subr.bf16.mxu0 0
    %759 = vmatpush1.bf16.msra.mxu0 0
    %760 = vmatprep.subr.bf16.mxu0 0
    %761 = vmatpush1.bf16.msra.mxu0 0
    %762 = vmatprep.subr.bf16.mxu0 0
    %763 = vmatpush1.bf16.msra.mxu0 0
    %764 = vmatprep.subr.bf16.mxu0 0
    %765 = vmatpush1.bf16.msra.mxu0 0
    %766 = vmatprep.subr.bf16.mxu0 0
    %767 = vmatpush1.bf16.msra.mxu0 0
    %768 = vmatprep.subr.bf16.mxu0 0
    %769 = vmatpush1.bf16.msra.mxu0 0
    %770 = vmatprep.mubr.bf16.mxu0 0
    %771 = vmatmul.mubr.bf16.gmra.mrb[0].mxu0 %v727
    %v772 = vpop.f32.mrb[0].mxu0
    %v773 = vadd.f32 0.0, %v772
    %v774 = vpop.f32.mrb[0].mxu0
    %v775 = vadd.f32 0.0, %v774
    %v776 = vpop.f32.mrb[0].mxu0
    %v777 = vadd.f32 0.0, %v776
    %v778 = vpop.f32.mrb[0].mxu0
    %v779 = vadd.f32 0.0, %v778
    %780 = vmatprep.mubr.bf16.mxu0 0
    %781 = vmatmul.mubr.bf16.gmra.mrb[0].mxu0 %v730
    %v782 = vpop.f32.mrb[0].mxu0
    %v783 = vadd.f32 0.0, %v782
    %v784 = vpop.f32.mrb[0].mxu0
    %v785 = vadd.f32 0.0, %v784
    %v786 = vpop.f32.mrb[0].mxu0
    %v787 = vadd.f32 0.0, %v786
    %v788 = vpop.f32.mrb[0].mxu0
    %v789 = vadd.f32 0.0, %v788
    %790 = vmatprep.mubr.bf16.mxu0 0
    %791 = vmatmul.mubr.bf16.gmra.mrb[0].mxu0 %v733
    %v792 = vpop.f32.mrb[0].mxu0
    %v793 = vadd.f32 0.0, %v792
    %v794 = vpop.f32.mrb[0].mxu0
    %v795 = vadd.f32 0.0, %v794
    %v796 = vpop.f32.mrb[0].mxu0
    %v797 = vadd.f32 0.0, %v796
    %v798 = vpop.f32.mrb[0].mxu0
    %v799 = vadd.f32 0.0, %v798
    %800 = vmatprep.mubr.bf16.mxu0 0
    %801 = vmatmul.mubr.bf16.gmra.mrb[0].mxu0 %v736
    %v802 = vpop.f32.mrb[0].mxu0
    %v803 = vadd.f32 0.0, %v802
    %v804 = vpop.f32.mrb[0].mxu0
    %v805 = vadd.f32 0.0, %v804
    %v806 = vpop.f32.mrb[0].mxu0
    %v807 = vadd.f32 0.0, %v806
    %v808 = vpop.f32.mrb[0].mxu0
    %v809 = vadd.f32 0.0, %v808
    %810 = vdwg.mxu0
    %v811 = vadd.f32 %v487, %v773
    %v812 = vadd.f32 %v488, %v775
    %v813 = vadd.f32 %v489, %v777
    %v814 = vadd.f32 %v490, %v779
    %v815 = vadd.f32 %v491, %v783
    %v816 = vadd.f32 %v492, %v785
    %v817 = vadd.f32 %v493, %v787
    %v818 = vadd.f32 %v494, %v789
    %v819 = vadd.f32 %v793, %v503
    %v820 = vadd.f32 %v795, %v504
    %v821 = vadd.f32 %v797, %v505
    %v822 = vadd.f32 %v799, %v506
    %v823 = vadd.f32 %v803, %v507
    %v824 = vadd.f32 %v805, %v508
    %v825 = vadd.f32 %v807, %v509
    %v826 = vadd.f32 %v809, %v510
    %v827 = vmul.f32 %v819, 0.70710677
    %v828 = vmul.f32 %v820, 0.70710677
    %v829 = vmul.f32 %v821, 0.70710677
    %v830 = vmul.f32 %v822, 0.70710677
    %v831 = vmul.f32 %v823, 0.70710677
    %v832 = vmul.f32 %v824, 0.70710677
    %v833 = vmul.f32 %v825, 0.70710677
    %v834 = vmul.f32 %v826, 0.70710677
    %s835 = scalar_lea.vmem %s2, 32
    %v836 = vld [vmem:[%s835] sm:$0xf]
    %v837 = vld [vmem:[%s835 + $0x4] sm:$0xf]
    %v838 = vld [vmem:[%s835 + $0x8] sm:$0xf]
    %v839 = vld [vmem:[%s835 + $0xc] sm:$0xf]
    %840 = vrot.lane.b32.xlu0 %v827, 1
    %v841 = vpop.permute.xlu0 %840
    %842 = vrot.lane.b32.xlu0 %v829, 1
    %v843 = vpop.permute.xlu0 %842
    %844 = vrot.lane.b32.xlu0 %v831, 1
    %v845 = vpop.permute.xlu0 %844
    %846 = vrot.lane.b32.xlu0 %v833, 1
    %v847 = vpop.permute.xlu0 %846
    %848 = vrot.lane.b32.xlu0 %v828, 1
    %v849 = vpop.permute.xlu0 %848
    %850 = vrot.lane.b32.xlu0 %v830, 1
    %v851 = vpop.permute.xlu0 %850
    %852 = vrot.lane.b32.xlu0 %v832, 1
    %v853 = vpop.permute.xlu0 %852
    %854 = vrot.lane.b32.xlu0 %v834, 1
    %v855 = vpop.permute.xlu0 %854
    %v856 = vsel %vm94, %v841, %v849
    %v857 = vsel %vm94, %v843, %v851
    %v858 = vsel %vm94, %v845, %v853
    %v859 = vsel %vm94, %v847, %v855
    %v860 = vsel %vm94, %v849, %v841
    %v861 = vsel %vm94, %v851, %v843
    %v862 = vsel %vm94, %v853, %v845
    %v863 = vsel %vm94, %v855, %v847
    %v864 = vmul.f32 %v860, %v64
    %v865 = vmul.f32 %v856, %v65
    %v866 = vmul.f32 %v861, %v64
    %v867 = vmul.f32 %v857, %v65
    %v868 = vmul.f32 %v862, %v64
    %v869 = vmul.f32 %v858, %v65
    %v870 = vmul.f32 %v863, %v64
    %v871 = vmul.f32 %v859, %v65
    %872 = vrot.lane.b32.xlu0 %v827, 127
    %v873 = vpop.permute.xlu0 %872
    %874 = vrot.lane.b32.xlu0 %v829, 127
    %v875 = vpop.permute.xlu0 %874
    %876 = vrot.lane.b32.xlu0 %v831, 127
    %v877 = vpop.permute.xlu0 %876
    %878 = vrot.lane.b32.xlu0 %v833, 127
    %v879 = vpop.permute.xlu0 %878
    %880 = vrot.lane.b32.xlu0 %v828, 127
    %v881 = vpop.permute.xlu0 %880
    %882 = vrot.lane.b32.xlu0 %v830, 127
    %v883 = vpop.permute.xlu0 %882
    %884 = vrot.lane.b32.xlu0 %v832, 127
    %v885 = vpop.permute.xlu0 %884
    %886 = vrot.lane.b32.xlu0 %v834, 127
    %v887 = vpop.permute.xlu0 %886
    %v888 = vsel %vm103, %v873, %v881
    %v889 = vsel %vm103, %v875, %v883
    %v890 = vsel %vm103, %v877, %v885
    %v891 = vsel %vm103, %v879, %v887
    %v892 = vsel %vm103, %v881, %v873
    %v893 = vsel %vm103, %v883, %v875
    %v894 = vsel %vm103, %v885, %v877
    %v895 = vsel %vm103, %v887, %v879
    %v896 = vmul.f32 %v888, %v70
    %v897 = vmul.f32 %v892, %v71
    %v898 = vmul.f32 %v889, %v70
    %v899 = vmul.f32 %v893, %v71
    %v900 = vmul.f32 %v890, %v70
    %v901 = vmul.f32 %v894, %v71
    %v902 = vmul.f32 %v891, %v70
    %v903 = vmul.f32 %v895, %v71
    %v904 = vpack.c.bf16 %v866, %v864
    %v905 = vpack.c.bf16 %v867, %v865
    %v906 = vpack.c.bf16 %v870, %v868
    %v907 = vpack.c.bf16 %v871, %v869
    %v908 = vpack.c.bf16 %v829, %v827
    %v909 = vpack.c.bf16 %v830, %v828
    %v910 = vpack.c.bf16 %v833, %v831
    %v911 = vpack.c.bf16 %v834, %v832
    %v912 = vpack.c.bf16 %v898, %v896
    %v913 = vpack.c.bf16 %v899, %v897
    %v914 = vpack.c.bf16 %v902, %v900
    %v915 = vpack.c.bf16 %v903, %v901
    %v920 = vunpack.c.l.b16 %v836
    %v921 = vunpack.c.l.b16 %v837
    %v922 = vunpack.c.l.b16 %v838
    %v923 = vunpack.c.l.b16 %v839
    %v924 = vpack.c.b16 %v921, %v920
    %v925 = vpack.c.b16 %v923, %v922
    %v927 = vsel %vm279, %v924, 0
    %v930 = vsel %vm279, %v925, 0
    %932 = vmatprep.subr.bf16.mxu0 %v905
    %933 = vmatpush1.bf16.msra.mxu0 %v904
    %934 = vmatprep.subr.bf16.mxu0 %v907
    %935 = vmatpush1.bf16.msra.mxu0 %v906
    %936 = vmatprep.subr.bf16.mxu0 %v909
    %937 = vmatpush1.bf16.msra.mxu0 %v908
    %938 = vmatprep.subr.bf16.mxu0 %v911
    %939 = vmatpush1.bf16.msra.mxu0 %v910
    %940 = vmatprep.subr.bf16.mxu0 %v913
    %941 = vmatpush1.bf16.msra.mxu0 %v912
    %942 = vmatprep.subr.bf16.mxu0 %v915
    %943 = vmatpush1.bf16.msra.mxu0 %v914
    %944 = vmatprep.subr.bf16.mxu0 0
    %945 = vmatpush1.bf16.msra.mxu0 0
    %946 = vmatprep.subr.bf16.mxu0 0
    %947 = vmatpush1.bf16.msra.mxu0 0
    %948 = vmatprep.subr.bf16.mxu0 0
    %949 = vmatpush1.bf16.msra.mxu0 0
    %950 = vmatprep.subr.bf16.mxu0 0
    %951 = vmatpush1.bf16.msra.mxu0 0
    %952 = vmatprep.subr.bf16.mxu0 0
    %953 = vmatpush1.bf16.msra.mxu0 0
    %954 = vmatprep.subr.bf16.mxu0 0
    %955 = vmatpush1.bf16.msra.mxu0 0
    %956 = vmatprep.subr.bf16.mxu0 0
    %957 = vmatpush1.bf16.msra.mxu0 0
    %958 = vmatprep.subr.bf16.mxu0 0
    %959 = vmatpush1.bf16.msra.mxu0 0
    %960 = vmatprep.subr.bf16.mxu0 0
    %961 = vmatpush1.bf16.msra.mxu0 0
    %962 = vmatprep.subr.bf16.mxu0 0
    %963 = vmatpush1.bf16.msra.mxu0 0
    %964 = vmatprep.mubr.bf16.mxu0 0
    %965 = vmatmul.mubr.bf16.gmra.mrb[0].mxu0 %v927
    %v966 = vpop.f32.mrb[0].mxu0
    %v967 = vadd.f32 0.0, %v966
    %v968 = vpop.f32.mrb[0].mxu0
    %v969 = vadd.f32 0.0, %v968
    %v970 = vpop.f32.mrb[0].mxu0
    %v971 = vadd.f32 0.0, %v970
    %v972 = vpop.f32.mrb[0].mxu0
    %v973 = vadd.f32 0.0, %v972
    %974 = vmatprep.mubr.bf16.mxu0 0
    %975 = vmatmul.mubr.bf16.gmra.mrb[0].mxu0 %v930
    %v976 = vpop.f32.mrb[0].mxu0
    %v977 = vadd.f32 0.0, %v976
    %v978 = vpop.f32.mrb[0].mxu0
    %v979 = vadd.f32 0.0, %v978
    %v980 = vpop.f32.mrb[0].mxu0
    %v981 = vadd.f32 0.0, %v980
    %v982 = vpop.f32.mrb[0].mxu0
    %v983 = vadd.f32 0.0, %v982
    %984 = vdwg.mxu0
    %v985 = vtanh.pop %v967
    %v986 = vtanh.pop %v969
    %v987 = vtanh.pop %v971
    %v988 = vtanh.pop %v973
    %v989 = vxor.u32 %v977, 2147483648
    %v990 = vxor.u32 %v979, 2147483648
    %v991 = vxor.u32 %v981, 2147483648
    %v992 = vxor.u32 %v983, 2147483648
    %v993 = vmul.f32 %v989, 1.442695
    %v994 = vpow.pop %v993
    %v995 = vmul.f32 %v990, 1.442695
    %v996 = vpow.pop %v995
    %v997 = vmul.f32 %v991, 1.442695
    %v998 = vpow.pop %v997
    %v999 = vmul.f32 %v992, 1.442695
    %v1000 = vpow.pop %v999
    %v1001 = vadd.f32 %v994, 1.0
    %v1002 = vadd.f32 %v996, 1.0
    %v1003 = vadd.f32 %v998, 1.0
    %v1004 = vadd.f32 %v1000, 1.0
    %v1005 = vrcp.pop %v1001
    %v1006 = vmul.f32 1.0, %v1005
    %v1007 = vrcp.pop %v1002
    %v1008 = vmul.f32 1.0, %v1007
    %v1009 = vrcp.pop %v1003
    %v1010 = vmul.f32 1.0, %v1009
    %v1011 = vrcp.pop %v1004
    %v1012 = vmul.f32 1.0, %v1011
    %v1013 = vmul.f32 %v985, %v1006
    %v1014 = vmul.f32 %v986, %v1008
    %v1015 = vmul.f32 %v987, %v1010
    %v1016 = vmul.f32 %v988, %v1012
    %s1017 = scalar_lea.vmem %s3, 64
    %v1018 = vld [vmem:[%s1017] sm:$0xf]
    %v1019 = vld [vmem:[%s1017 + $0x4] sm:$0xf]
    %v1020 = vld [vmem:[%s1017 + $0x8] sm:$0xf]
    %v1021 = vld [vmem:[%s1017 + $0xc] sm:$0xf]
    %v1022 = vld [vmem:[%s1017 + $0x10] sm:$0xf]
    %v1023 = vld [vmem:[%s1017 + $0x14] sm:$0xf]
    %v1024 = vld [vmem:[%s1017 + $0x18] sm:$0xf]
    %v1025 = vld [vmem:[%s1017 + $0x1c] sm:$0xf]
    %v1026 = vpack.c.bf16 %v1015, %v1013
    %v1027 = vpack.c.bf16 %v1016, %v1014
    %v1036 = vunpack.c.l.b16 %v1018
    %v1037 = vunpack.c.l.b16 %v1019
    %v1038 = vunpack.c.l.b16 %v1020
    %v1039 = vunpack.c.l.b16 %v1021
    %v1040 = vunpack.c.l.b16 %v1022
    %v1041 = vunpack.c.l.b16 %v1023
    %v1042 = vunpack.c.l.b16 %v1024
    %v1043 = vunpack.c.l.b16 %v1025
    %v1044 = vpack.c.b16 %v1037, %v1036
    %v1045 = vpack.c.b16 %v1039, %v1038
    %v1046 = vpack.c.b16 %v1041, %v1040
    %v1047 = vpack.c.b16 %v1043, %v1042
    %v1049 = vsel %vm401, %v1044, 0
    %v1052 = vsel %vm401, %v1045, 0
    %v1055 = vsel %vm401, %v1046, 0
    %v1058 = vsel %vm401, %v1047, 0
    %1060 = vmatprep.subr.bf16.mxu0 %v1027
    %1061 = vmatpush1.bf16.msra.mxu0 %v1026
    %1062 = vmatprep.subr.bf16.mxu0 0
    %1063 = vmatpush1.bf16.msra.mxu0 0
    %1064 = vmatprep.subr.bf16.mxu0 0
    %1065 = vmatpush1.bf16.msra.mxu0 0
    %1066 = vmatprep.subr.bf16.mxu0 0
    %1067 = vmatpush1.bf16.msra.mxu0 0
    %1068 = vmatprep.subr.bf16.mxu0 0
    %1069 = vmatpush1.bf16.msra.mxu0 0
    %1070 = vmatprep.subr.bf16.mxu0 0
    %1071 = vmatpush1.bf16.msra.mxu0 0
    %1072 = vmatprep.subr.bf16.mxu0 0
    %1073 = vmatpush1.bf16.msra.mxu0 0
    %1074 = vmatprep.subr.bf16.mxu0 0
    %1075 = vmatpush1.bf16.msra.mxu0 0
    %1076 = vmatprep.subr.bf16.mxu0 0
    %1077 = vmatpush1.bf16.msra.mxu0 0
    %1078 = vmatprep.subr.bf16.mxu0 0
    %1079 = vmatpush1.bf16.msra.mxu0 0
    %1080 = vmatprep.subr.bf16.mxu0 0
    %1081 = vmatpush1.bf16.msra.mxu0 0
    %1082 = vmatprep.subr.bf16.mxu0 0
    %1083 = vmatpush1.bf16.msra.mxu0 0
    %1084 = vmatprep.subr.bf16.mxu0 0
    %1085 = vmatpush1.bf16.msra.mxu0 0
    %1086 = vmatprep.subr.bf16.mxu0 0
    %1087 = vmatpush1.bf16.msra.mxu0 0
    %1088 = vmatprep.subr.bf16.mxu0 0
    %1089 = vmatpush1.bf16.msra.mxu0 0
    %1090 = vmatprep.subr.bf16.mxu0 0
    %1091 = vmatpush1.bf16.msra.mxu0 0
    %1092 = vmatprep.mubr.bf16.mxu0 0
    %1093 = vmatmul.mubr.bf16.gmra.mrb[0].mxu0 %v1049
    %v1094 = vpop.f32.mrb[0].mxu0
    %v1095 = vadd.f32 0.0, %v1094
    %v1096 = vpop.f32.mrb[0].mxu0
    %v1097 = vadd.f32 0.0, %v1096
    %v1098 = vpop.f32.mrb[0].mxu0
    %v1099 = vadd.f32 0.0, %v1098
    %v1100 = vpop.f32.mrb[0].mxu0
    %v1101 = vadd.f32 0.0, %v1100
    %1102 = vmatprep.mubr.bf16.mxu0 0
    %1103 = vmatmul.mubr.bf16.gmra.mrb[0].mxu0 %v1052
    %v1104 = vpop.f32.mrb[0].mxu0
    %v1105 = vadd.f32 0.0, %v1104
    %v1106 = vpop.f32.mrb[0].mxu0
    %v1107 = vadd.f32 0.0, %v1106
    %v1108 = vpop.f32.mrb[0].mxu0
    %v1109 = vadd.f32 0.0, %v1108
    %v1110 = vpop.f32.mrb[0].mxu0
    %v1111 = vadd.f32 0.0, %v1110
    %1112 = vmatprep.mubr.bf16.mxu0 0
    %1113 = vmatmul.mubr.bf16.gmra.mrb[0].mxu0 %v1055
    %v1114 = vpop.f32.mrb[0].mxu0
    %v1115 = vadd.f32 0.0, %v1114
    %v1116 = vpop.f32.mrb[0].mxu0
    %v1117 = vadd.f32 0.0, %v1116
    %v1118 = vpop.f32.mrb[0].mxu0
    %v1119 = vadd.f32 0.0, %v1118
    %v1120 = vpop.f32.mrb[0].mxu0
    %v1121 = vadd.f32 0.0, %v1120
    %1122 = vmatprep.mubr.bf16.mxu0 0
    %1123 = vmatmul.mubr.bf16.gmra.mrb[0].mxu0 %v1058
    %v1124 = vpop.f32.mrb[0].mxu0
    %v1125 = vadd.f32 0.0, %v1124
    %v1126 = vpop.f32.mrb[0].mxu0
    %v1127 = vadd.f32 0.0, %v1126
    %v1128 = vpop.f32.mrb[0].mxu0
    %v1129 = vadd.f32 0.0, %v1128
    %v1130 = vpop.f32.mrb[0].mxu0
    %v1131 = vadd.f32 0.0, %v1130
    %1132 = vdwg.mxu0
    %v1133 = vadd.f32 %v811, %v1095
    %v1134 = vadd.f32 %v812, %v1097
    %v1135 = vadd.f32 %v813, %v1099
    %v1136 = vadd.f32 %v814, %v1101
    %v1137 = vadd.f32 %v815, %v1105
    %v1138 = vadd.f32 %v816, %v1107
    %v1139 = vadd.f32 %v817, %v1109
    %v1140 = vadd.f32 %v818, %v1111
    %v1141 = vadd.f32 %v1115, %v827
    %v1142 = vadd.f32 %v1117, %v828
    %v1143 = vadd.f32 %v1119, %v829
    %v1144 = vadd.f32 %v1121, %v830
    %v1145 = vadd.f32 %v1125, %v831
    %v1146 = vadd.f32 %v1127, %v832
    %v1147 = vadd.f32 %v1129, %v833
    %v1148 = vadd.f32 %v1131, %v834
    %v1149 = vmul.f32 %v1141, 0.70710677
    %v1150 = vmul.f32 %v1142, 0.70710677
    %v1151 = vmul.f32 %v1143, 0.70710677
    %v1152 = vmul.f32 %v1144, 0.70710677
    %v1153 = vmul.f32 %v1145, 0.70710677
    %v1154 = vmul.f32 %v1146, 0.70710677
    %v1155 = vmul.f32 %v1147, 0.70710677
    %v1156 = vmul.f32 %v1148, 0.70710677
    %s1157 = scalar_lea.vmem %s2, 48
    %v1158 = vld [vmem:[%s1157] sm:$0xf]
    %v1159 = vld [vmem:[%s1157 + $0x4] sm:$0xf]
    %v1160 = vld [vmem:[%s1157 + $0x8] sm:$0xf]
    %v1161 = vld [vmem:[%s1157 + $0xc] sm:$0xf]
    %1162 = vrot.lane.b32.xlu0 %v1149, 2
    %v1163 = vpop.permute.xlu0 %1162
    %1164 = vrot.lane.b32.xlu0 %v1151, 2
    %v1165 = vpop.permute.xlu0 %1164
    %1166 = vrot.lane.b32.xlu0 %v1153, 2
    %v1167 = vpop.permute.xlu0 %1166
    %1168 = vrot.lane.b32.xlu0 %v1155, 2
    %v1169 = vpop.permute.xlu0 %1168
    %1170 = vrot.lane.b32.xlu0 %v1150, 2
    %v1171 = vpop.permute.xlu0 %1170
    %1172 = vrot.lane.b32.xlu0 %v1152, 2
    %v1173 = vpop.permute.xlu0 %1172
    %1174 = vrot.lane.b32.xlu0 %v1154, 2
    %v1175 = vpop.permute.xlu0 %1174
    %1176 = vrot.lane.b32.xlu0 %v1156, 2
    %v1177 = vpop.permute.xlu0 %1176
    %v1178 = vsel %vm532, %v1163, %v1171
    %v1179 = vsel %vm532, %v1165, %v1173
    %v1180 = vsel %vm532, %v1167, %v1175
    %v1181 = vsel %vm532, %v1169, %v1177
    %v1182 = vsel %vm532, %v1171, %v1163
    %v1183 = vsel %vm532, %v1173, %v1165
    %v1184 = vsel %vm532, %v1175, %v1167
    %v1185 = vsel %vm532, %v1177, %v1169
    %v1186 = vmul.f32 %v1182, %v76
    %v1187 = vmul.f32 %v1178, %v77
    %v1188 = vmul.f32 %v1183, %v76
    %v1189 = vmul.f32 %v1179, %v77
    %v1190 = vmul.f32 %v1184, %v76
    %v1191 = vmul.f32 %v1180, %v77
    %v1192 = vmul.f32 %v1185, %v76
    %v1193 = vmul.f32 %v1181, %v77
    %1194 = vrot.lane.b32.xlu0 %v1149, 126
    %v1195 = vpop.permute.xlu0 %1194
    %1196 = vrot.lane.b32.xlu0 %v1151, 126
    %v1197 = vpop.permute.xlu0 %1196
    %1198 = vrot.lane.b32.xlu0 %v1153, 126
    %v1199 = vpop.permute.xlu0 %1198
    %1200 = vrot.lane.b32.xlu0 %v1155, 126
    %v1201 = vpop.permute.xlu0 %1200
    %1202 = vrot.lane.b32.xlu0 %v1150, 126
    %v1203 = vpop.permute.xlu0 %1202
    %1204 = vrot.lane.b32.xlu0 %v1152, 126
    %v1205 = vpop.permute.xlu0 %1204
    %1206 = vrot.lane.b32.xlu0 %v1154, 126
    %v1207 = vpop.permute.xlu0 %1206
    %1208 = vrot.lane.b32.xlu0 %v1156, 126
    %v1209 = vpop.permute.xlu0 %1208
    %v1210 = vsel %vm565, %v1195, %v1203
    %v1211 = vsel %vm565, %v1197, %v1205
    %v1212 = vsel %vm565, %v1199, %v1207
    %v1213 = vsel %vm565, %v1201, %v1209
    %v1214 = vsel %vm565, %v1203, %v1195
    %v1215 = vsel %vm565, %v1205, %v1197
    %v1216 = vsel %vm565, %v1207, %v1199
    %v1217 = vsel %vm565, %v1209, %v1201
    %v1218 = vmul.f32 %v1210, %v82
    %v1219 = vmul.f32 %v1214, %v83
    %v1220 = vmul.f32 %v1211, %v82
    %v1221 = vmul.f32 %v1215, %v83
    %v1222 = vmul.f32 %v1212, %v82
    %v1223 = vmul.f32 %v1216, %v83
    %v1224 = vmul.f32 %v1213, %v82
    %v1225 = vmul.f32 %v1217, %v83
    %v1226 = vpack.c.bf16 %v1188, %v1186
    %v1227 = vpack.c.bf16 %v1189, %v1187
    %v1228 = vpack.c.bf16 %v1192, %v1190
    %v1229 = vpack.c.bf16 %v1193, %v1191
    %v1230 = vpack.c.bf16 %v1151, %v1149
    %v1231 = vpack.c.bf16 %v1152, %v1150
    %v1232 = vpack.c.bf16 %v1155, %v1153
    %v1233 = vpack.c.bf16 %v1156, %v1154
    %v1234 = vpack.c.bf16 %v1220, %v1218
    %v1235 = vpack.c.bf16 %v1221, %v1219
    %v1236 = vpack.c.bf16 %v1224, %v1222
    %v1237 = vpack.c.bf16 %v1225, %v1223
    %v1242 = vunpack.c.l.b16 %v1158
    %v1243 = vunpack.c.l.b16 %v1159
    %v1244 = vunpack.c.l.b16 %v1160
    %v1245 = vunpack.c.l.b16 %v1161
    %v1246 = vpack.c.b16 %v1243, %v1242
    %v1247 = vpack.c.b16 %v1245, %v1244
    %v1249 = vsel %vm279, %v1246, 0
    %v1252 = vsel %vm279, %v1247, 0
    %1254 = vmatprep.subr.bf16.mxu0 %v1227
    %1255 = vmatpush1.bf16.msra.mxu0 %v1226
    %1256 = vmatprep.subr.bf16.mxu0 %v1229
    %1257 = vmatpush1.bf16.msra.mxu0 %v1228
    %1258 = vmatprep.subr.bf16.mxu0 %v1231
    %1259 = vmatpush1.bf16.msra.mxu0 %v1230
    %1260 = vmatprep.subr.bf16.mxu0 %v1233
    %1261 = vmatpush1.bf16.msra.mxu0 %v1232
    %1262 = vmatprep.subr.bf16.mxu0 %v1235
    %1263 = vmatpush1.bf16.msra.mxu0 %v1234
    %1264 = vmatprep.subr.bf16.mxu0 %v1237
    %1265 = vmatpush1.bf16.msra.mxu0 %v1236
    %1266 = vmatprep.subr.bf16.mxu0 0
    %1267 = vmatpush1.bf16.msra.mxu0 0
    %1268 = vmatprep.subr.bf16.mxu0 0
    %1269 = vmatpush1.bf16.msra.mxu0 0
    %1270 = vmatprep.subr.bf16.mxu0 0
    %1271 = vmatpush1.bf16.msra.mxu0 0
    %1272 = vmatprep.subr.bf16.mxu0 0
    %1273 = vmatpush1.bf16.msra.mxu0 0
    %1274 = vmatprep.subr.bf16.mxu0 0
    %1275 = vmatpush1.bf16.msra.mxu0 0
    %1276 = vmatprep.subr.bf16.mxu0 0
    %1277 = vmatpush1.bf16.msra.mxu0 0
    %1278 = vmatprep.subr.bf16.mxu0 0
    %1279 = vmatpush1.bf16.msra.mxu0 0
    %1280 = vmatprep.subr.bf16.mxu0 0
    %1281 = vmatpush1.bf16.msra.mxu0 0
    %1282 = vmatprep.subr.bf16.mxu0 0
    %1283 = vmatpush1.bf16.msra.mxu0 0
    %1284 = vmatprep.subr.bf16.mxu0 0
    %1285 = vmatpush1.bf16.msra.mxu0 0
    %1286 = vmatprep.mubr.bf16.mxu0 0
    %1287 = vmatmul.mubr.bf16.gmra.mrb[0].mxu0 %v1249
    %v1288 = vpop.f32.mrb[0].mxu0
    %v1289 = vadd.f32 0.0, %v1288
    %v1290 = vpop.f32.mrb[0].mxu0
    %v1291 = vadd.f32 0.0, %v1290
    %v1292 = vpop.f32.mrb[0].mxu0
    %v1293 = vadd.f32 0.0, %v1292
    %v1294 = vpop.f32.mrb[0].mxu0
    %v1295 = vadd.f32 0.0, %v1294
    %1296 = vmatprep.mubr.bf16.mxu0 0
    %1297 = vmatmul.mubr.bf16.gmra.mrb[0].mxu0 %v1252
    %v1298 = vpop.f32.mrb[0].mxu0
    %v1299 = vadd.f32 0.0, %v1298
    %v1300 = vpop.f32.mrb[0].mxu0
    %v1301 = vadd.f32 0.0, %v1300
    %v1302 = vpop.f32.mrb[0].mxu0
    %v1303 = vadd.f32 0.0, %v1302
    %v1304 = vpop.f32.mrb[0].mxu0
    %v1305 = vadd.f32 0.0, %v1304
    %1306 = vdwg.mxu0
    %v1307 = vtanh.pop %v1289
    %v1308 = vtanh.pop %v1291
    %v1309 = vtanh.pop %v1293
    %v1310 = vtanh.pop %v1295
    %v1311 = vxor.u32 %v1299, 2147483648
    %v1312 = vxor.u32 %v1301, 2147483648
    %v1313 = vxor.u32 %v1303, 2147483648
    %v1314 = vxor.u32 %v1305, 2147483648
    %v1315 = vmul.f32 %v1311, 1.442695
    %v1316 = vpow.pop %v1315
    %v1317 = vmul.f32 %v1312, 1.442695
    %v1318 = vpow.pop %v1317
    %v1319 = vmul.f32 %v1313, 1.442695
    %v1320 = vpow.pop %v1319
    %v1321 = vmul.f32 %v1314, 1.442695
    %v1322 = vpow.pop %v1321
    %v1323 = vadd.f32 %v1316, 1.0
    %v1324 = vadd.f32 %v1318, 1.0
    %v1325 = vadd.f32 %v1320, 1.0
    %v1326 = vadd.f32 %v1322, 1.0
    %v1327 = vrcp.pop %v1323
    %v1328 = vmul.f32 1.0, %v1327
    %v1329 = vrcp.pop %v1324
    %v1330 = vmul.f32 1.0, %v1329
    %v1331 = vrcp.pop %v1325
    %v1332 = vmul.f32 1.0, %v1331
    %v1333 = vrcp.pop %v1326
    %v1334 = vmul.f32 1.0, %v1333
    %v1335 = vmul.f32 %v1307, %v1328
    %v1336 = vmul.f32 %v1308, %v1330
    %v1337 = vmul.f32 %v1309, %v1332
    %v1338 = vmul.f32 %v1310, %v1334
    %s1339 = scalar_lea.vmem %s3, 96
    %v1340 = vld [vmem:[%s1339] sm:$0xf]
    %v1341 = vld [vmem:[%s1339 + $0x4] sm:$0xf]
    %v1342 = vld [vmem:[%s1339 + $0x8] sm:$0xf]
    %v1343 = vld [vmem:[%s1339 + $0xc] sm:$0xf]
    %v1344 = vld [vmem:[%s1339 + $0x10] sm:$0xf]
    %v1345 = vld [vmem:[%s1339 + $0x14] sm:$0xf]
    %v1346 = vld [vmem:[%s1339 + $0x18] sm:$0xf]
    %v1347 = vld [vmem:[%s1339 + $0x1c] sm:$0xf]
    %v1348 = vpack.c.bf16 %v1337, %v1335
    %v1349 = vpack.c.bf16 %v1338, %v1336
    %v1358 = vunpack.c.l.b16 %v1340
    %v1359 = vunpack.c.l.b16 %v1341
    %v1360 = vunpack.c.l.b16 %v1342
    %v1361 = vunpack.c.l.b16 %v1343
    %v1362 = vunpack.c.l.b16 %v1344
    %v1363 = vunpack.c.l.b16 %v1345
    %v1364 = vunpack.c.l.b16 %v1346
    %v1365 = vunpack.c.l.b16 %v1347
    %v1366 = vpack.c.b16 %v1359, %v1358
    %v1367 = vpack.c.b16 %v1361, %v1360
    %v1368 = vpack.c.b16 %v1363, %v1362
    %v1369 = vpack.c.b16 %v1365, %v1364
    %v1371 = vsel %vm401, %v1366, 0
    %v1374 = vsel %vm401, %v1367, 0
    %v1377 = vsel %vm401, %v1368, 0
    %v1380 = vsel %vm401, %v1369, 0
    %1382 = vmatprep.subr.bf16.mxu0 %v1349
    %1383 = vmatpush1.bf16.msra.mxu0 %v1348
    %1384 = vmatprep.subr.bf16.mxu0 0
    %1385 = vmatpush1.bf16.msra.mxu0 0
    %1386 = vmatprep.subr.bf16.mxu0 0
    %1387 = vmatpush1.bf16.msra.mxu0 0
    %1388 = vmatprep.subr.bf16.mxu0 0
    %1389 = vmatpush1.bf16.msra.mxu0 0
    %1390 = vmatprep.subr.bf16.mxu0 0
    %1391 = vmatpush1.bf16.msra.mxu0 0
    %1392 = vmatprep.subr.bf16.mxu0 0
    %1393 = vmatpush1.bf16.msra.mxu0 0
    %1394 = vmatprep.subr.bf16.mxu0 0
    %1395 = vmatpush1.bf16.msra.mxu0 0
    %1396 = vmatprep.subr.bf16.mxu0 0
    %1397 = vmatpush1.bf16.msra.mxu0 0
    %1398 = vmatprep.subr.bf16.mxu0 0
    %1399 = vmatpush1.bf16.msra.mxu0 0
    %1400 = vmatprep.subr.bf16.mxu0 0
    %1401 = vmatpush1.bf16.msra.mxu0 0
    %1402 = vmatprep.subr.bf16.mxu0 0
    %1403 = vmatpush1.bf16.msra.mxu0 0
    %1404 = vmatprep.subr.bf16.mxu0 0
    %1405 = vmatpush1.bf16.msra.mxu0 0
    %1406 = vmatprep.subr.bf16.mxu0 0
    %1407 = vmatpush1.bf16.msra.mxu0 0
    %1408 = vmatprep.subr.bf16.mxu0 0
    %1409 = vmatpush1.bf16.msra.mxu0 0
    %1410 = vmatprep.subr.bf16.mxu0 0
    %1411 = vmatpush1.bf16.msra.mxu0 0
    %1412 = vmatprep.subr.bf16.mxu0 0
    %1413 = vmatpush1.bf16.msra.mxu0 0
    %1414 = vmatprep.mubr.bf16.mxu0 0
    %1415 = vmatmul.mubr.bf16.gmra.mrb[0].mxu0 %v1371
    %v1416 = vpop.f32.mrb[0].mxu0
    %v1417 = vadd.f32 0.0, %v1416
    %v1418 = vpop.f32.mrb[0].mxu0
    %v1419 = vadd.f32 0.0, %v1418
    %v1420 = vpop.f32.mrb[0].mxu0
    %v1421 = vadd.f32 0.0, %v1420
    %v1422 = vpop.f32.mrb[0].mxu0
    %v1423 = vadd.f32 0.0, %v1422
    %1424 = vmatprep.mubr.bf16.mxu0 0
    %1425 = vmatmul.mubr.bf16.gmra.mrb[0].mxu0 %v1374
    %v1426 = vpop.f32.mrb[0].mxu0
    %v1427 = vadd.f32 0.0, %v1426
    %v1428 = vpop.f32.mrb[0].mxu0
    %v1429 = vadd.f32 0.0, %v1428
    %v1430 = vpop.f32.mrb[0].mxu0
    %v1431 = vadd.f32 0.0, %v1430
    %v1432 = vpop.f32.mrb[0].mxu0
    %v1433 = vadd.f32 0.0, %v1432
    %1434 = vmatprep.mubr.bf16.mxu0 0
    %1435 = vmatmul.mubr.bf16.gmra.mrb[0].mxu0 %v1377
    %v1436 = vpop.f32.mrb[0].mxu0
    %v1437 = vpop.f32.mrb[0].mxu0
    %v1438 = vpop.f32.mrb[0].mxu0
    %v1439 = vpop.f32.mrb[0].mxu0
    %1440 = vmatprep.mubr.bf16.mxu0 0
    %1441 = vmatmul.mubr.bf16.gmra.mrb[0].mxu0 %v1380
    %v1442 = vpop.f32.mrb[0].mxu0
    %v1443 = vpop.f32.mrb[0].mxu0
    %v1444 = vpop.f32.mrb[0].mxu0
    %v1445 = vpop.f32.mrb[0].mxu0
    %1446 = vdwg.mxu0
    %v1447 = vadd.f32 %v1133, %v1417
    %v1448 = vadd.f32 %v1134, %v1419
    %v1449 = vadd.f32 %v1135, %v1421
    %v1450 = vadd.f32 %v1136, %v1423
    %v1451 = vadd.f32 %v1137, %v1427
    %v1452 = vadd.f32 %v1138, %v1429
    %v1453 = vadd.f32 %v1139, %v1431
    %v1454 = vadd.f32 %v1140, %v1433
    %v1455 = vmul.f32 %v1447, 0.5
    %v1456 = vmul.f32 %v1448, 0.5
    %v1457 = vmul.f32 %v1449, 0.5
    %v1458 = vmul.f32 %v1450, 0.5
    %v1459 = vmul.f32 %v1451, 0.5
    %v1460 = vmul.f32 %v1452, 0.5
    %v1461 = vmul.f32 %v1453, 0.5
    %v1462 = vmul.f32 %v1454, 0.5
    %v1463 = vmax.f32 %v1455, 0.0
    %v1464 = vmax.f32 %v1456, 0.0
    %v1465 = vmax.f32 %v1457, 0.0
    %v1466 = vmax.f32 %v1458, 0.0
    %v1467 = vmax.f32 %v1459, 0.0
    %v1468 = vmax.f32 %v1460, 0.0
    %v1469 = vmax.f32 %v1461, 0.0
    %v1470 = vmax.f32 %v1462, 0.0
    %v1471 = vld [vmem:[%s4] sm:$0xf]
    %v1472 = vld [vmem:[%s4 + $0x4] sm:$0xf]
    %v1473 = vld [vmem:[%s4 + $0x8] sm:$0xf]
    %v1474 = vld [vmem:[%s4 + $0xc] sm:$0xf]
    %v1475 = vpack.c.bf16 %v1465, %v1463
    %v1476 = vpack.c.bf16 %v1466, %v1464
    %v1477 = vpack.c.bf16 %v1469, %v1467
    %v1478 = vpack.c.bf16 %v1470, %v1468
    %v1479 = vld [vmem:[%s5] sm:$0xff]
    %v1480 = vld [vmem:[%s5 + $0x8] sm:$0xff]
    %v1481 = vld [vmem:[%s5 + $0x10] sm:$0xff]
    %v1482 = vld [vmem:[%s5 + $0x18] sm:$0xff]
    %1484 = vset.pattern.permute.xlu0 0
    %1485 = vperm.xlu0 %1484, %v1479
    %v1486 = vpop.permute.xlu0 %1485
    %1489 = vset.pattern.permute.xlu0 0
    %1490 = vperm.xlu0 %1489, %v1480
    %v1491 = vpop.permute.xlu0 %1490
    %1494 = vset.pattern.permute.xlu0 0
    %1495 = vperm.xlu0 %1494, %v1481
    %v1496 = vpop.permute.xlu0 %1495
    %1499 = vset.pattern.permute.xlu0 0
    %1500 = vperm.xlu0 %1499, %v1482
    %v1501 = vpop.permute.xlu0 %1500
    %v1507 = vunpack.c.l.b16 %v1471
    %v1508 = vunpack.c.l.b16 %v1472
    %v1509 = vunpack.c.l.b16 %v1473
    %v1510 = vunpack.c.l.b16 %v1474
    %v1511 = vpack.c.b16 %v1508, %v1507
    %v1512 = vpack.c.b16 %v1510, %v1509
    %vm1513 = vcmask 261120
    %v1515 = vsel %vm1513, %v1511, 0
    %v1518 = vsel %vm1513, %v1512, 0
    %1520 = vmatprep.subr.bf16.mxu0 %v1476
    %1521 = vmatpush1.bf16.msra.mxu0 %v1475
    %1522 = vmatprep.subr.bf16.mxu0 %v1478
    %1523 = vmatpush1.bf16.msra.mxu0 %v1477
    %1524 = vmatprep.subr.bf16.mxu0 0
    %1525 = vmatpush1.bf16.msra.mxu0 0
    %1526 = vmatprep.subr.bf16.mxu0 0
    %1527 = vmatpush1.bf16.msra.mxu0 0
    %1528 = vmatprep.subr.bf16.mxu0 0
    %1529 = vmatpush1.bf16.msra.mxu0 0
    %1530 = vmatprep.subr.bf16.mxu0 0
    %1531 = vmatpush1.bf16.msra.mxu0 0
    %1532 = vmatprep.subr.bf16.mxu0 0
    %1533 = vmatpush1.bf16.msra.mxu0 0
    %1534 = vmatprep.subr.bf16.mxu0 0
    %1535 = vmatpush1.bf16.msra.mxu0 0
    %1536 = vmatprep.subr.bf16.mxu0 0
    %1537 = vmatpush1.bf16.msra.mxu0 0
    %1538 = vmatprep.subr.bf16.mxu0 0
    %1539 = vmatpush1.bf16.msra.mxu0 0
    %1540 = vmatprep.subr.bf16.mxu0 0
    %1541 = vmatpush1.bf16.msra.mxu0 0
    %1542 = vmatprep.subr.bf16.mxu0 0
    %1543 = vmatpush1.bf16.msra.mxu0 0
    %1544 = vmatprep.subr.bf16.mxu0 0
    %1545 = vmatpush1.bf16.msra.mxu0 0
    %1546 = vmatprep.subr.bf16.mxu0 0
    %1547 = vmatpush1.bf16.msra.mxu0 0
    %1548 = vmatprep.subr.bf16.mxu0 0
    %1549 = vmatpush1.bf16.msra.mxu0 0
    %1550 = vmatprep.subr.bf16.mxu0 0
    %1551 = vmatpush1.bf16.msra.mxu0 0
    %1552 = vmatprep.mubr.bf16.mxu0 0
    %1553 = vmatmul.mubr.bf16.gmra.mrb[0].mxu0 %v1515
    %v1554 = vpop.f32.mrb[0].mxu0
    %v1555 = vadd.f32 %v1486, %v1554
    %v1556 = vpop.f32.mrb[0].mxu0
    %v1557 = vadd.f32 %v1486, %v1556
    %v1558 = vpop.f32.mrb[0].mxu0
    %v1559 = vadd.f32 %v1491, %v1558
    %v1560 = vpop.f32.mrb[0].mxu0
    %v1561 = vadd.f32 %v1491, %v1560
    %1562 = vmatprep.mubr.bf16.mxu0 0
    %1563 = vmatmul.mubr.bf16.gmra.mrb[0].mxu0 %v1518
    %v1564 = vpop.f32.mrb[0].mxu0
    %v1565 = vadd.f32 %v1496, %v1564
    %v1566 = vpop.f32.mrb[0].mxu0
    %v1567 = vadd.f32 %v1496, %v1566
    %v1568 = vpop.f32.mrb[0].mxu0
    %v1569 = vadd.f32 %v1501, %v1568
    %v1570 = vpop.f32.mrb[0].mxu0
    %v1571 = vadd.f32 %v1501, %v1570
    %1572 = vdwg.mxu0
    %v1573 = vmax.f32 %v1555, 0.0
    %v1574 = vmax.f32 %v1557, 0.0
    %v1575 = vmax.f32 %v1559, 0.0
    %v1576 = vmax.f32 %v1561, 0.0
    %v1577 = vmax.f32 %v1565, 0.0
    %v1578 = vmax.f32 %v1567, 0.0
    %v1579 = vmax.f32 %v1569, 0.0
    %v1580 = vmax.f32 %v1571, 0.0
    %v1581 = vld [vmem:[%s6] sm:$0x1]
    %v1582 = vpack.c.bf16 %v1575, %v1573
    %v1583 = vpack.c.bf16 %v1576, %v1574
    %v1584 = vpack.c.bf16 %v1579, %v1577
    %v1585 = vpack.c.bf16 %v1580, %v1578
    %v1586 = vld [vmem:[#allocation2] sm:$0x1]
    %1588 = vset.pattern.permute.xlu0 0
    %1589 = vperm.xlu0 %1588, %v1586
    %v1590 = vpop.permute.xlu0 %1589
    %v1592 = vlaneseq
    %v1593 = vshrl.u32 %v1592, 7
    %v1594 = vsub.s32 0, %v1593
    %v1595 = vrot.slane %v1590, %v1594
    %v1597 = vsel %vm1513, %v1581, 0
    %1599 = vmatprep.subr.bf16.mxu0 %v1583
    %1600 = vmatpush1.bf16.msra.mxu0 %v1582
    %1601 = vmatprep.subr.bf16.mxu0 %v1585
    %1602 = vmatpush1.bf16.msra.mxu0 %v1584
    %1603 = vmatprep.subr.bf16.mxu0 0
    %1604 = vmatpush1.bf16.msra.mxu0 0
    %1605 = vmatprep.subr.bf16.mxu0 0
    %1606 = vmatpush1.bf16.msra.mxu0 0
    %1607 = vmatprep.subr.bf16.mxu0 0
    %1608 = vmatpush1.bf16.msra.mxu0 0
    %1609 = vmatprep.subr.bf16.mxu0 0
    %1610 = vmatpush1.bf16.msra.mxu0 0
    %1611 = vmatprep.subr.bf16.mxu0 0
    %1612 = vmatpush1.bf16.msra.mxu0 0
    %1613 = vmatprep.subr.bf16.mxu0 0
    %1614 = vmatpush1.bf16.msra.mxu0 0
    %1615 = vmatprep.subr.bf16.mxu0 0
    %1616 = vmatpush1.bf16.msra.mxu0 0
    %1617 = vmatprep.subr.bf16.mxu0 0
    %1618 = vmatpush1.bf16.msra.mxu0 0
    %1619 = vmatprep.subr.bf16.mxu0 0
    %1620 = vmatpush1.bf16.msra.mxu0 0
    %1621 = vmatprep.subr.bf16.mxu0 0
    %1622 = vmatpush1.bf16.msra.mxu0 0
    %1623 = vmatprep.subr.bf16.mxu0 0
    %1624 = vmatpush1.bf16.msra.mxu0 0
    %1625 = vmatprep.subr.bf16.mxu0 0
    %1626 = vmatpush1.bf16.msra.mxu0 0
    %1627 = vmatprep.subr.bf16.mxu0 0
    %1628 = vmatpush1.bf16.msra.mxu0 0
    %1629 = vmatprep.subr.bf16.mxu0 0
    %1630 = vmatpush1.bf16.msra.mxu0 0
    %1631 = vmatprep.mubr.bf16.mxu0 0
    %1632 = vmatmul.mubr.bf16.gmra.mrb[0].mxu0 %v1597
    %v1633 = vpop.f32.mrb[0].mxu0
    %v1634 = vadd.f32 %v1595, %v1633
    %v1635 = vpop.f32.mrb[0].mxu0
    %v1636 = vadd.f32 %v1595, %v1635
    %v1637 = vpop.f32.mrb[0].mxu0
    %v1638 = vpop.f32.mrb[0].mxu0
    %1639 = vdwg.mxu0
    %v1642 = vcombine.low %v1634, %v1636
    %v1644 = vunpack.c.l.s4 1966171168
    %v1645 = vunpack.c.0.s8 %v1644
    %v1646 = vlaneseq
    %v1647 = vshrl.u32 %v1646, 7
    %v1648 = vsub.s32 %v1645, %v1647
    %v1649 = vrot.slane %v1642, %v1648
    %v1651 = vunpack.c.l.s4 1966171168
    %v1652 = vunpack.c.0.s8 %v1651
    %v1653 = vlaneseq
    %v1654 = vshrl.u32 %v1653, 7
    %v1655 = vsub.s32 %v1652, %v1654
    %v1656 = vrot.slane %v1649, %v1655
    %v1658 = vlaneseq
    %vm1659 = vcmp.ge.s32.totalorder %v1658, 0
    %vm1660 = vcmp.lt.s32.totalorder %v1658, 256
    %vm1661 = vmand %vm1659, %vm1660
    %1662 = vst.msk [vmem:[#allocation3] sm:$0x3] %vm1661, %v1656
    // Predicated region
    $region34: #{tpu_custom_call.1} parent=1 // pred_check
      _
    $region35: #{tpu_custom_call.1} parent=1 // pred_check_branch
      %1664 = sbr.rel (0) target = $region37
    $region36: #{tpu_custom_call.1} parent=1 // pred_region
      %s1666 = ssub.s32 32, 32
      %1667 = vsyncadd [#allocation4], %s1666
      %s1669 = sshll.u32 [#allocation3], 4
      %s1670 = int_to_ptr.vmem [resolvable:$true] %s1669
      %1672 = dma.vmem_to_hbm [thread:$0]  %s1670, 32, %s8, [#allocation4]
    $region37: #{tpu_custom_call.1} parent=1 // pred_fallthru
      _
    // Predicated region
    $region38: #{tpu_custom_call.1} parent=1 // pred_check
      _
    $region39: #{tpu_custom_call.1} parent=1 // pred_check_branch
      %1674 = sbr.rel (0) target = $region41
    $region40: #{tpu_custom_call.1} parent=1 // pred_region
      %1675 = dma.done [#allocation4], 32
    $region41: #{tpu_custom_call.1} parent=1 // pred_fallthru
      _
    %1676 = vsyncpa [#allocation4], 1

</llo_original>
